<compile_context>
chip_gen: v6e
topology: v6e:2x2x1
jax: 0.10.0
libtpu: 0.0.40
codegen_flags: <defaults>
</compile_context>

<pallas_src>
import functools

import jax
import jax.numpy as jnp
from jax.experimental import pallas as pl
from jax.experimental.pallas import tpu as pltpu

_LANE = 128
_MIB = 1024 * 1024


def _round_up(n, m):
    return ((n + m - 1) // m) * m


def _sigmoid(z):
    # exp and the approximate reciprocal both issue on the EUP slot (otherwise
    # idle); one Newton-Raphson step on the VPU restores ~full f32 accuracy.
    z = jnp.clip(z, -30.0, 30.0)
    d = 1.0 + jnp.exp(-z)
    r = pl.reciprocal(d, approx=True)
    return r * (2.0 - d * r)


def _linear_t(h, w_ref, b_ref):
    """(out, in) @ (in, tb) -> (out, tb); MXU operands in native weight dtype,
    f32 accumulation, f32 bias add (bias is an (out, 1) column)."""
    w = w_ref[...]
    z = jnp.dot(w, h.astype(w.dtype), preferred_element_type=jnp.float32)
    return z + b_ref[...].astype(jnp.float32)


def _make_kernel(n_x2prev, n_v2s_rest, n_s2y):
    """Whole MLPsvy1x forward for one batch tile; params VMEM-resident,
    activations held as (features, batch_tile) so everything is lane-dense."""

    def kernel(*refs):
        x_ref, o_ref = refs[0], refs[-1]
        p = refs[1:-1]
        idx = 0

        def take(n):
            nonlocal idx
            r = p[idx:idx + n]
            idx += n
            return r

        # f_x2prev
        h = x_ref[...]                                   # (dim_x, tb)
        for _ in range(n_x2prev):
            w, b = take(2)
            h = _sigmoid(_linear_t(h, w, b))
        prev = h

        # f_prev2v / f_prev2parav
        wv, bv = take(2)
        v = _sigmoid(_linear_t(prev, wv, bv))
        wp, bp = take(2)
        parav = _sigmoid(_linear_t(prev, wp, bp))

        # first f_vparav2s layer: W @ cat([v; parav]) == Wv @ v + Wp @ parav
        wcv_ref, wcp_ref, bc_ref = take(3)
        wcv, wcp = wcv_ref[...], wcp_ref[...]
        z = jnp.dot(wcv, v.astype(wcv.dtype), preferred_element_type=jnp.float32)
        z = z + jnp.dot(wcp, parav.astype(wcp.dtype),
                        preferred_element_type=jnp.float32)
        h = _sigmoid(z + bc_ref[...].astype(jnp.float32))

        # remaining f_vparav2s layers
        for _ in range(n_v2s_rest):
            w, b = take(2)
            h = _sigmoid(_linear_t(h, w, b))

        # f_s2y: sigmoid after every Linear except the last (lastactv=False)
        for j in range(n_s2y):
            w, b = take(2)
            h = _linear_t(h, w, b)
            if j < n_s2y - 1:
                h = _sigmoid(h)

        o_ref[...] = h.astype(o_ref.dtype)               # (dim_y, tb), lane-dense

    return kernel


def _flatten_params(params, mxu_dtype):
    """Kernel-ordered parameter list.  Weights transposed to (out, in) and cast
    to the MXU operand dtype; biases stay f32 as (out, 1) columns.  The concat
    layer's weight is split (v-half / parav-half) to avoid a runtime concat."""
    flat = []

    def add(w, b):
        flat.append(jnp.asarray(w).T.astype(mxu_dtype))              # (out, in)
        flat.append(jnp.asarray(b).reshape(-1, 1).astype(jnp.float32))

    for w, b in params["x2prev"]:
        add(w, b)
    wv, bv = params["prev2v"]
    add(wv, bv)
    wp, bp = params["prev2parav"]
    add(wp, bp)

    dim_v = int(wv.shape[1])
    v2s = list(params["vparav2s"])
    w0, b0 = v2s[0]
    w0t = jnp.asarray(w0).T.astype(mxu_dtype)            # (out0, dim_v+dim_parav)
    flat.append(w0t[:, :dim_v])                          # v-half
    flat.append(w0t[:, dim_v:])                          # parav-half
    flat.append(jnp.asarray(b0).reshape(-1, 1).astype(jnp.float32))
    for w, b in v2s[1:]:
        add(w, b)

    s2y = list(params["s2y"])
    for w, b in s2y:
        add(w, b)
    dim_y = int(s2y[-1][0].shape[1])

    return flat, len(params["x2prev"]), len(v2s) - 1, len(s2y), dim_y


def _static_dims(params):
    """(d_in, d_out) of every Linear, sigmoid output widths, widest feature dim."""
    lin, act = [], []

    def rec(w, has_act):
        d_in, d_out = int(w.shape[0]), int(w.shape[1])
        lin.append((d_in, d_out))
        if has_act:
            act.append(d_out)

    for w, _ in params["x2prev"]:
        rec(w, True)
    rec(params["prev2v"][0], True)
    rec(params["prev2parav"][0], True)
    for w, _ in params["vparav2s"]:
        rec(w, True)
    s2y = params["s2y"]
    for j, (w, _) in enumerate(s2y):
        rec(w, j < len(s2y) - 1)
    max_feat = max([d for _, d in lin] + [lin[0][0]])
    return lin, act, max_feat


@functools.partial(jax.jit, static_argnames=("block_b", "mxu_dtype"))
def mlpsvy1x_forward(x, params, *, block_b=4096, mxu_dtype=jnp.bfloat16):
    """MLPsvy1x.forward(x) via one Pallas call, gridded over the batch.

    x:      (batch, dim_x)
    params: dict with keys "x2prev", "prev2v", "prev2parav", "vparav2s", "s2y";
            each Linear is (W, b) with W stored as (in, out) (= torch W.T).
    """
    batch, dim_x = x.shape
    flat, n_x2prev, n_v2s_rest, n_s2y, dim_y = _flatten_params(params, mxu_dtype)
    lin_dims, act_dims, max_feat = _static_dims(params)

    # Batch tiling: the batch sits on the lane axis, so tiles are 128-multiples.
    block_b = max(_LANE, _round_up(int(block_b), _LANE))
    b_ceil = _round_up(batch, _LANE)
    tb = min(block_b, b_ceil)
    # Keep >= 2 grid steps when the batch allows it so both v7x TensorCores get
    # work (the batch grid axis is marked "parallel"); no harm on v5e/v6e.
    if b_ceil >= 2 * _LANE:
        tb = min(tb, max(_LANE, (b_ceil // 2) // _LANE * _LANE))
    b_pad = _round_up(batch, tb)
    if b_pad != batch:
        x = jnp.pad(x, ((0, b_pad - batch), (0, 0)))
    x_t = x.T                                            # (dim_x, b_pad): batch on lanes
    grid = (b_pad // tb,)

    # Specs: activation tiles pipelined over the grid; params VMEM-resident
    # via constant index_maps.
    in_specs = [pl.BlockSpec((dim_x, tb), lambda i: (0, i))]
    for a in flat:
        in_specs.append(pl.BlockSpec(a.shape, lambda i: (0, 0)))
    out_specs = pl.BlockSpec((dim_y, tb), lambda i: (0, i))

    # VMEM budget: double-buffered x/out tiles + resident params + a few f32
    # intermediates of the widest layer + headroom, capped at 3/4 of the
    # generation's physical VMEM (v7x: 64 MiB/TC, v5e/v6e: 128 MiB).
    itemsize = jnp.dtype(x.dtype).itemsize
    tile_bytes = (dim_x + dim_y) * tb * itemsize
    param_bytes = sum(int(a.size) * jnp.dtype(a.dtype).itemsize for a in flat)
    act_bytes = 4 * _round_up(max_feat, 8) * tb * 4
    try:
        cap = int(getattr(pltpu.get_tpu_info(), "vmem_capacity_bytes", 64 * _MIB))
    except Exception:
        cap = 64 * _MIB
    vmem_limit = int(min(2 * (tile_bytes + param_bytes) + act_bytes + 8 * _MIB,
                         (3 * cap) // 4))

    # Cost hint so XLA schedules the wrapper transpose/slice around the kernel.
    flops = 2 * b_pad * sum(di * do for di, do in lin_dims)
    transc = b_pad * sum(act_dims)
    bytes_accessed = (dim_x + dim_y) * b_pad * itemsize + param_bytes
    cost = pl.CostEstimate(flops=int(flops), transcendentals=int(transc),
                           bytes_accessed=int(bytes_accessed))

    out = pl.pallas_call(
        _make_kernel(n_x2prev, n_v2s_rest, n_s2y),
        out_shape=jax.ShapeDtypeStruct((dim_y, b_pad), x.dtype),
        grid=grid,
        in_specs=in_specs,
        out_specs=out_specs,
        compiler_params=pltpu.CompilerParams(
            dimension_semantics=("parallel",),
            vmem_limit_bytes=vmem_limit),
        cost_estimate=cost,
    )(x_t, *flat)

    y = out[:, :batch]                                   # (dim_y, batch)
    if dim_y == 1:                                       # mirror torch's .squeeze(-1)
        return y[0]
    return y.T


def init_mlpsvy1x_params(key, dim_x, dims_postx2prev, dim_v, dim_parav,
                         dims_postv2s, dims_posts2prey, dim_y):
    """Mimics nn.Linear's default U(-1/sqrt(in), 1/sqrt(in)) init.
    Weights are stored as (in, out) == torch Linear.weight.T."""

    def linear(k, d_in, d_out):
        kw, kb = jax.random.split(k)
        bound = 1.0 / (d_in ** 0.5)
        w = jax.random.uniform(kw, (d_in, d_out), jnp.float32, -bound, bound)
        b = jax.random.uniform(kb, (d_out,), jnp.float32, -bound, bound)
        return w, b

    def chain(k, dims):
        layers = []
        for i in range(len(dims) - 1):
            k, kl = jax.random.split(k)
            layers.append(linear(kl, dims[i], dims[i + 1]))
        return k, layers

    dim_prev = dims_postx2prev[-1]
    dim_s = dims_postv2s[-1]

    key, x2prev = chain(key, [dim_x] + list(dims_postx2prev))
    key, k1 = jax.random.split(key)
    prev2v = linear(k1, dim_prev, dim_v)
    key, k2 = jax.random.split(key)
    prev2parav = linear(k2, dim_prev, dim_parav)
    key, vparav2s = chain(key, [dim_v + dim_parav] + list(dims_postv2s))
    key, s2y = chain(key, [dim_s] + list(dims_posts2prey) + [dim_y])

    return {
        "x2prev": x2prev,
        "prev2v": prev2v,
        "prev2parav": prev2parav,
        "vparav2s": vparav2s,
        "s2y": s2y,
    }


def _reference_forward(x, params):
    sig = jax.nn.sigmoid
    h = x
    for w, b in params["x2prev"]:
        h = sig(h @ w + b)
    prev = h
    wv, bv = params["prev2v"]
    wp, bp = params["prev2parav"]
    v = sig(prev @ wv + bv)
    parav = sig(prev @ wp + bp)
    h = jnp.concatenate([v, parav], axis=-1)
    for w, b in params["vparav2s"]:
        h = sig(h @ w + b)
    s2y = params["s2y"]
    for j, (w, b) in enumerate(s2y):
        h = h @ w + b
        if j < len(s2y) - 1:
            h = sig(h)
    if h.shape[-1] == 1:
        h = h[..., 0]
    return h


if __name__ == "__main__":
    # Small shapes consistent with MLPsvy1x's constructor.
    batch = 500                     # exercises batch padding (-> 512) and a 2-step grid
    dim_x = 16
    dims_postx2prev = [32, 24]      # dim_prev = 24
    dim_v = 8
    dim_parav = 6
    dims_postv2s = [20, 12]         # dim_s = 12
    dims_posts2prey = [10]
    dim_y = 1

    key = jax.random.PRNGKey(0)
    key, kx = jax.random.split(key)
    x = jax.random.normal(kx, (batch, dim_x), jnp.float32)
    params = init_mlpsvy1x_params(key, dim_x, dims_postx2prev, dim_v, dim_parav,
                                  dims_postv2s, dims_posts2prey, dim_y)

    ref = _reference_forward(x, params)

    # f32 MXU operands: matches the f32 reference to approx-sigmoid accuracy.
    y32 = jax.block_until_ready(mlpsvy1x_forward(x, params, mxu_dtype=jnp.float32))
    assert y32.shape == ref.shape, (y32.shape, ref.shape)
    err32 = float(jnp.max(jnp.abs(y32 - ref)))
    assert err32 < 5e-4, err32

    # Default path: bf16 MXU operands with f32 accumulation + f32 sigmoid.
    y16 = jax.block_until_ready(mlpsvy1x_forward(x, params))
    assert y16.shape == ref.shape, (y16.shape, ref.shape)
    err16 = float(jnp.max(jnp.abs(y16 - ref)))
    assert err16 < 2e-2, err16

    print("KERNEL_OK")
</pallas_src>

<mosaic_0001>
module attributes {stable_mosaic.version = 11 : i64} {
  func.func @kernel(%arg0: i32, %arg1: memref<16x256xf32, #tpu.memory_space<vmem>>, %arg2: memref<32x16xf32, #tpu.memory_space<vmem>>, %arg3: memref<32x1xf32, #tpu.memory_space<vmem>>, %arg4: memref<24x32xf32, #tpu.memory_space<vmem>>, %arg5: memref<24x1xf32, #tpu.memory_space<vmem>>, %arg6: memref<8x24xf32, #tpu.memory_space<vmem>>, %arg7: memref<8x1xf32, #tpu.memory_space<vmem>>, %arg8: memref<6x24xf32, #tpu.memory_space<vmem>>, %arg9: memref<6x1xf32, #tpu.memory_space<vmem>>, %arg10: memref<20x8xf32, #tpu.memory_space<vmem>>, %arg11: memref<20x6xf32, #tpu.memory_space<vmem>>, %arg12: memref<20x1xf32, #tpu.memory_space<vmem>>, %arg13: memref<12x20xf32, #tpu.memory_space<vmem>>, %arg14: memref<12x1xf32, #tpu.memory_space<vmem>>, %arg15: memref<10x12xf32, #tpu.memory_space<vmem>>, %arg16: memref<10x1xf32, #tpu.memory_space<vmem>>, %arg17: memref<1x10xf32, #tpu.memory_space<vmem>>, %arg18: memref<1x1xf32, #tpu.memory_space<vmem>>, %arg19: memref<1x256xf32, #tpu.memory_space<vmem>>) attributes {dimension_semantics = [#tpu.dimension_semantics<parallel>], iteration_bounds = array<i64: 2>, scalar_prefetch = 0 : i64, scratch_operands = 0 : i64, tpu.core_type = #tpu.core_type<tc>, window_params = [{transform_indices = @transform_0, window_bounds = array<i64: 16, 256>}, {pipeline_mode = #tpu.pipeline_mode<synchronous>, transform_indices = @transform_1, window_bounds = array<i64: 32, 16>}, {pipeline_mode = #tpu.pipeline_mode<synchronous>, transform_indices = @transform_2, window_bounds = array<i64: 32, 1>}, {pipeline_mode = #tpu.pipeline_mode<synchronous>, transform_indices = @transform_3, window_bounds = array<i64: 24, 32>}, {pipeline_mode = #tpu.pipeline_mode<synchronous>, transform_indices = @transform_4, window_bounds = array<i64: 24, 1>}, {pipeline_mode = #tpu.pipeline_mode<synchronous>, transform_indices = @transform_5, window_bounds = array<i64: 8, 24>}, {pipeline_mode = #tpu.pipeline_mode<synchronous>, transform_indices = @transform_6, window_bounds = array<i64: 8, 1>}, {pipeline_mode = #tpu.pipeline_mode<synchronous>, transform_indices = @transform_7, window_bounds = array<i64: 6, 24>}, {pipeline_mode = #tpu.pipeline_mode<synchronous>, transform_indices = @transform_8, window_bounds = array<i64: 6, 1>}, {pipeline_mode = #tpu.pipeline_mode<synchronous>, transform_indices = @transform_9, window_bounds = array<i64: 20, 8>}, {pipeline_mode = #tpu.pipeline_mode<synchronous>, transform_indices = @transform_10, window_bounds = array<i64: 20, 6>}, {pipeline_mode = #tpu.pipeline_mode<synchronous>, transform_indices = @transform_11, window_bounds = array<i64: 20, 1>}, {pipeline_mode = #tpu.pipeline_mode<synchronous>, transform_indices = @transform_12, window_bounds = array<i64: 12, 20>}, {pipeline_mode = #tpu.pipeline_mode<synchronous>, transform_indices = @transform_13, window_bounds = array<i64: 12, 1>}, {pipeline_mode = #tpu.pipeline_mode<synchronous>, transform_indices = @transform_14, window_bounds = array<i64: 10, 12>}, {pipeline_mode = #tpu.pipeline_mode<synchronous>, transform_indices = @transform_15, window_bounds = array<i64: 10, 1>}, {pipeline_mode = #tpu.pipeline_mode<synchronous>, transform_indices = @transform_16, window_bounds = array<i64: 1, 10>}, {pipeline_mode = #tpu.pipeline_mode<synchronous>, transform_indices = @transform_17, window_bounds = array<i64: 1, 1>}, {transform_indices = @transform_18, window_bounds = array<i64: 1, 256>}]} {
    %c0 = arith.constant 0 : index
    %c0_0 = arith.constant 0 : index
    %0 = vector.load %arg1[%c0, %c0_0] : memref<16x256xf32, #tpu.memory_space<vmem>>, vector<16x256xf32>
    %c0_1 = arith.constant 0 : index
    %c0_2 = arith.constant 0 : index
    %1 = vector.load %arg2[%c0_1, %c0_2] : memref<32x16xf32, #tpu.memory_space<vmem>>, vector<32x16xf32>
    %cst = arith.constant dense<0.000000e+00> : vector<32x256xf32>
    %2 = tpu.matmul %1, %0, %cst {dimension_numbers = #tpu.dot_dimension_numbers<[1], [0], [0], [1], [0, 0, 1, 1], [], []>} : vector<32x16xf32>, vector<16x256xf32>, vector<32x256xf32> -> vector<32x256xf32>
    %c0_3 = arith.constant 0 : index
    %c0_4 = arith.constant 0 : index
    %3 = vector.load %arg3[%c0_3, %c0_4] : memref<32x1xf32, #tpu.memory_space<vmem>>, vector<32x1xf32>
    %4 = vector.broadcast %3 : vector<32x1xf32> to vector<32x256xf32>
    %5 = arith.addf %2, %4 : vector<32x256xf32>
    %cst_5 = arith.constant -3.000000e+01 : f32
    %cst_6 = arith.constant 3.000000e+01 : f32
    %6 = vector.broadcast %cst_5 : f32 to vector<32x256xf32>
    %7 = arith.maximumf %6, %5 : vector<32x256xf32>
    %8 = vector.broadcast %cst_6 : f32 to vector<32x256xf32>
    %9 = arith.minimumf %8, %7 : vector<32x256xf32>
    %cst_7 = arith.constant 0.000000e+00 : f32
    %10 = vector.broadcast %cst_7 : f32 to vector<32x256xf32>
    %11 = arith.subf %10, %9 : vector<32x256xf32>
    %12 = math.exp %11 : vector<32x256xf32>
    %cst_8 = arith.constant 1.000000e+00 : f32
    %13 = vector.broadcast %cst_8 : f32 to vector<32x256xf32>
    %14 = arith.addf %13, %12 : vector<32x256xf32>
    %15 = tpu.reciprocal %14 {approx = true} : vector<32x256xf32> -> vector<32x256xf32>
    %16 = arith.mulf %14, %15 : vector<32x256xf32>
    %cst_9 = arith.constant 2.000000e+00 : f32
    %17 = vector.broadcast %cst_9 : f32 to vector<32x256xf32>
    %18 = arith.subf %17, %16 : vector<32x256xf32>
    %19 = arith.mulf %15, %18 : vector<32x256xf32>
    %c0_10 = arith.constant 0 : index
    %c0_11 = arith.constant 0 : index
    %20 = vector.load %arg4[%c0_10, %c0_11] : memref<24x32xf32, #tpu.memory_space<vmem>>, vector<24x32xf32>
    %cst_12 = arith.constant dense<0.000000e+00> : vector<24x256xf32>
    %21 = tpu.matmul %20, %19, %cst_12 {dimension_numbers = #tpu.dot_dimension_numbers<[1], [0], [0], [1], [0, 0, 1, 1], [], []>} : vector<24x32xf32>, vector<32x256xf32>, vector<24x256xf32> -> vector<24x256xf32>
    %c0_13 = arith.constant 0 : index
    %c0_14 = arith.constant 0 : index
    %22 = vector.load %arg5[%c0_13, %c0_14] : memref<24x1xf32, #tpu.memory_space<vmem>>, vector<24x1xf32>
    %23 = vector.broadcast %22 : vector<24x1xf32> to vector<24x256xf32>
    %24 = arith.addf %21, %23 : vector<24x256xf32>
    %cst_15 = arith.constant -3.000000e+01 : f32
    %cst_16 = arith.constant 3.000000e+01 : f32
    %25 = vector.broadcast %cst_15 : f32 to vector<24x256xf32>
    %26 = arith.maximumf %25, %24 : vector<24x256xf32>
    %27 = vector.broadcast %cst_16 : f32 to vector<24x256xf32>
    %28 = arith.minimumf %27, %26 : vector<24x256xf32>
    %cst_17 = arith.constant 0.000000e+00 : f32
    %29 = vector.broadcast %cst_17 : f32 to vector<24x256xf32>
    %30 = arith.subf %29, %28 : vector<24x256xf32>
    %31 = math.exp %30 : vector<24x256xf32>
    %cst_18 = arith.constant 1.000000e+00 : f32
    %32 = vector.broadcast %cst_18 : f32 to vector<24x256xf32>
    %33 = arith.addf %32, %31 : vector<24x256xf32>
    %34 = tpu.reciprocal %33 {approx = true} : vector<24x256xf32> -> vector<24x256xf32>
    %35 = arith.mulf %33, %34 : vector<24x256xf32>
    %cst_19 = arith.constant 2.000000e+00 : f32
    %36 = vector.broadcast %cst_19 : f32 to vector<24x256xf32>
    %37 = arith.subf %36, %35 : vector<24x256xf32>
    %38 = arith.mulf %34, %37 : vector<24x256xf32>
    %c0_20 = arith.constant 0 : index
    %c0_21 = arith.constant 0 : index
    %39 = vector.load %arg6[%c0_20, %c0_21] : memref<8x24xf32, #tpu.memory_space<vmem>>, vector<8x24xf32>
    %cst_22 = arith.constant dense<0.000000e+00> : vector<8x256xf32>
    %40 = tpu.matmul %39, %38, %cst_22 {dimension_numbers = #tpu.dot_dimension_numbers<[1], [0], [0], [1], [0, 0, 1, 1], [], []>} : vector<8x24xf32>, vector<24x256xf32>, vector<8x256xf32> -> vector<8x256xf32>
    %c0_23 = arith.constant 0 : index
    %c0_24 = arith.constant 0 : index
    %41 = vector.load %arg7[%c0_23, %c0_24] : memref<8x1xf32, #tpu.memory_space<vmem>>, vector<8x1xf32>
    %42 = vector.broadcast %41 : vector<8x1xf32> to vector<8x256xf32>
    %43 = arith.addf %40, %42 : vector<8x256xf32>
    %cst_25 = arith.constant -3.000000e+01 : f32
    %cst_26 = arith.constant 3.000000e+01 : f32
    %44 = vector.broadcast %cst_25 : f32 to vector<8x256xf32>
    %45 = arith.maximumf %44, %43 : vector<8x256xf32>
    %46 = vector.broadcast %cst_26 : f32 to vector<8x256xf32>
    %47 = arith.minimumf %46, %45 : vector<8x256xf32>
    %cst_27 = arith.constant 0.000000e+00 : f32
    %48 = vector.broadcast %cst_27 : f32 to vector<8x256xf32>
    %49 = arith.subf %48, %47 : vector<8x256xf32>
    %50 = math.exp %49 : vector<8x256xf32>
    %cst_28 = arith.constant 1.000000e+00 : f32
    %51 = vector.broadcast %cst_28 : f32 to vector<8x256xf32>
    %52 = arith.addf %51, %50 : vector<8x256xf32>
    %53 = tpu.reciprocal %52 {approx = true} : vector<8x256xf32> -> vector<8x256xf32>
    %54 = arith.mulf %52, %53 : vector<8x256xf32>
    %cst_29 = arith.constant 2.000000e+00 : f32
    %55 = vector.broadcast %cst_29 : f32 to vector<8x256xf32>
    %56 = arith.subf %55, %54 : vector<8x256xf32>
    %57 = arith.mulf %53, %56 : vector<8x256xf32>
    %c0_30 = arith.constant 0 : index
    %c0_31 = arith.constant 0 : index
    %58 = vector.load %arg8[%c0_30, %c0_31] : memref<6x24xf32, #tpu.memory_space<vmem>>, vector<6x24xf32>
    %cst_32 = arith.constant dense<0.000000e+00> : vector<6x256xf32>
    %59 = tpu.matmul %58, %38, %cst_32 {dimension_numbers = #tpu.dot_dimension_numbers<[1], [0], [0], [1], [0, 0, 1, 1], [], []>} : vector<6x24xf32>, vector<24x256xf32>, vector<6x256xf32> -> vector<6x256xf32>
    %c0_33 = arith.constant 0 : index
    %c0_34 = arith.constant 0 : index
    %60 = vector.load %arg9[%c0_33, %c0_34] : memref<6x1xf32, #tpu.memory_space<vmem>>, vector<6x1xf32>
    %61 = vector.broadcast %60 : vector<6x1xf32> to vector<6x256xf32>
    %62 = arith.addf %59, %61 : vector<6x256xf32>
    %cst_35 = arith.constant -3.000000e+01 : f32
    %cst_36 = arith.constant 3.000000e+01 : f32
    %63 = vector.broadcast %cst_35 : f32 to vector<6x256xf32>
    %64 = arith.maximumf %63, %62 : vector<6x256xf32>
    %65 = vector.broadcast %cst_36 : f32 to vector<6x256xf32>
    %66 = arith.minimumf %65, %64 : vector<6x256xf32>
    %cst_37 = arith.constant 0.000000e+00 : f32
    %67 = vector.broadcast %cst_37 : f32 to vector<6x256xf32>
    %68 = arith.subf %67, %66 : vector<6x256xf32>
    %69 = math.exp %68 : vector<6x256xf32>
    %cst_38 = arith.constant 1.000000e+00 : f32
    %70 = vector.broadcast %cst_38 : f32 to vector<6x256xf32>
    %71 = arith.addf %70, %69 : vector<6x256xf32>
    %72 = tpu.reciprocal %71 {approx = true} : vector<6x256xf32> -> vector<6x256xf32>
    %73 = arith.mulf %71, %72 : vector<6x256xf32>
    %cst_39 = arith.constant 2.000000e+00 : f32
    %74 = vector.broadcast %cst_39 : f32 to vector<6x256xf32>
    %75 = arith.subf %74, %73 : vector<6x256xf32>
    %76 = arith.mulf %72, %75 : vector<6x256xf32>
    %c0_40 = arith.constant 0 : index
    %c0_41 = arith.constant 0 : index
    %77 = vector.load %arg10[%c0_40, %c0_41] : memref<20x8xf32, #tpu.memory_space<vmem>>, vector<20x8xf32>
    %c0_42 = arith.constant 0 : index
    %c0_43 = arith.constant 0 : index
    %78 = vector.load %arg11[%c0_42, %c0_43] : memref<20x6xf32, #tpu.memory_space<vmem>>, vector<20x6xf32>
    %cst_44 = arith.constant dense<0.000000e+00> : vector<20x256xf32>
    %79 = tpu.matmul %77, %57, %cst_44 {dimension_numbers = #tpu.dot_dimension_numbers<[1], [0], [0], [1], [0, 0, 1, 1], [], []>} : vector<20x8xf32>, vector<8x256xf32>, vector<20x256xf32> -> vector<20x256xf32>
    %cst_45 = arith.constant dense<0.000000e+00> : vector<20x256xf32>
    %80 = tpu.matmul %78, %76, %cst_45 {dimension_numbers = #tpu.dot_dimension_numbers<[1], [0], [0], [1], [0, 0, 1, 1], [], []>} : vector<20x6xf32>, vector<6x256xf32>, vector<20x256xf32> -> vector<20x256xf32>
    %81 = arith.addf %79, %80 : vector<20x256xf32>
    %c0_46 = arith.constant 0 : index
    %c0_47 = arith.constant 0 : index
    %82 = vector.load %arg12[%c0_46, %c0_47] : memref<20x1xf32, #tpu.memory_space<vmem>>, vector<20x1xf32>
    %83 = vector.broadcast %82 : vector<20x1xf32> to vector<20x256xf32>
    %84 = arith.addf %81, %83 : vector<20x256xf32>
    %cst_48 = arith.constant -3.000000e+01 : f32
    %cst_49 = arith.constant 3.000000e+01 : f32
    %85 = vector.broadcast %cst_48 : f32 to vector<20x256xf32>
    %86 = arith.maximumf %85, %84 : vector<20x256xf32>
    %87 = vector.broadcast %cst_49 : f32 to vector<20x256xf32>
    %88 = arith.minimumf %87, %86 : vector<20x256xf32>
    %cst_50 = arith.constant 0.000000e+00 : f32
    %89 = vector.broadcast %cst_50 : f32 to vector<20x256xf32>
    %90 = arith.subf %89, %88 : vector<20x256xf32>
    %91 = math.exp %90 : vector<20x256xf32>
    %cst_51 = arith.constant 1.000000e+00 : f32
    %92 = vector.broadcast %cst_51 : f32 to vector<20x256xf32>
    %93 = arith.addf %92, %91 : vector<20x256xf32>
    %94 = tpu.reciprocal %93 {approx = true} : vector<20x256xf32> -> vector<20x256xf32>
    %95 = arith.mulf %93, %94 : vector<20x256xf32>
    %cst_52 = arith.constant 2.000000e+00 : f32
    %96 = vector.broadcast %cst_52 : f32 to vector<20x256xf32>
    %97 = arith.subf %96, %95 : vector<20x256xf32>
    %98 = arith.mulf %94, %97 : vector<20x256xf32>
    %c0_53 = arith.constant 0 : index
    %c0_54 = arith.constant 0 : index
    %99 = vector.load %arg13[%c0_53, %c0_54] : memref<12x20xf32, #tpu.memory_space<vmem>>, vector<12x20xf32>
    %cst_55 = arith.constant dense<0.000000e+00> : vector<12x256xf32>
    %100 = tpu.matmul %99, %98, %cst_55 {dimension_numbers = #tpu.dot_dimension_numbers<[1], [0], [0], [1], [0, 0, 1, 1], [], []>} : vector<12x20xf32>, vector<20x256xf32>, vector<12x256xf32> -> vector<12x256xf32>
    %c0_56 = arith.constant 0 : index
    %c0_57 = arith.constant 0 : index
    %101 = vector.load %arg14[%c0_56, %c0_57] : memref<12x1xf32, #tpu.memory_space<vmem>>, vector<12x1xf32>
    %102 = vector.broadcast %101 : vector<12x1xf32> to vector<12x256xf32>
    %103 = arith.addf %100, %102 : vector<12x256xf32>
    %cst_58 = arith.constant -3.000000e+01 : f32
    %cst_59 = arith.constant 3.000000e+01 : f32
    %104 = vector.broadcast %cst_58 : f32 to vector<12x256xf32>
    %105 = arith.maximumf %104, %103 : vector<12x256xf32>
    %106 = vector.broadcast %cst_59 : f32 to vector<12x256xf32>
    %107 = arith.minimumf %106, %105 : vector<12x256xf32>
    %cst_60 = arith.constant 0.000000e+00 : f32
    %108 = vector.broadcast %cst_60 : f32 to vector<12x256xf32>
    %109 = arith.subf %108, %107 : vector<12x256xf32>
    %110 = math.exp %109 : vector<12x256xf32>
    %cst_61 = arith.constant 1.000000e+00 : f32
    %111 = vector.broadcast %cst_61 : f32 to vector<12x256xf32>
    %112 = arith.addf %111, %110 : vector<12x256xf32>
    %113 = tpu.reciprocal %112 {approx = true} : vector<12x256xf32> -> vector<12x256xf32>
    %114 = arith.mulf %112, %113 : vector<12x256xf32>
    %cst_62 = arith.constant 2.000000e+00 : f32
    %115 = vector.broadcast %cst_62 : f32 to vector<12x256xf32>
    %116 = arith.subf %115, %114 : vector<12x256xf32>
    %117 = arith.mulf %113, %116 : vector<12x256xf32>
    %c0_63 = arith.constant 0 : index
    %c0_64 = arith.constant 0 : index
    %118 = vector.load %arg15[%c0_63, %c0_64] : memref<10x12xf32, #tpu.memory_space<vmem>>, vector<10x12xf32>
    %cst_65 = arith.constant dense<0.000000e+00> : vector<10x256xf32>
    %119 = tpu.matmul %118, %117, %cst_65 {dimension_numbers = #tpu.dot_dimension_numbers<[1], [0], [0], [1], [0, 0, 1, 1], [], []>} : vector<10x12xf32>, vector<12x256xf32>, vector<10x256xf32> -> vector<10x256xf32>
    %c0_66 = arith.constant 0 : index
    %c0_67 = arith.constant 0 : index
    %120 = vector.load %arg16[%c0_66, %c0_67] : memref<10x1xf32, #tpu.memory_space<vmem>>, vector<10x1xf32>
    %121 = vector.broadcast %120 : vector<10x1xf32> to vector<10x256xf32>
    %122 = arith.addf %119, %121 : vector<10x256xf32>
    %cst_68 = arith.constant -3.000000e+01 : f32
    %cst_69 = arith.constant 3.000000e+01 : f32
    %123 = vector.broadcast %cst_68 : f32 to vector<10x256xf32>
    %124 = arith.maximumf %123, %122 : vector<10x256xf32>
    %125 = vector.broadcast %cst_69 : f32 to vector<10x256xf32>
    %126 = arith.minimumf %125, %124 : vector<10x256xf32>
    %cst_70 = arith.constant 0.000000e+00 : f32
    %127 = vector.broadcast %cst_70 : f32 to vector<10x256xf32>
    %128 = arith.subf %127, %126 : vector<10x256xf32>
    %129 = math.exp %128 : vector<10x256xf32>
    %cst_71 = arith.constant 1.000000e+00 : f32
    %130 = vector.broadcast %cst_71 : f32 to vector<10x256xf32>
    %131 = arith.addf %130, %129 : vector<10x256xf32>
    %132 = tpu.reciprocal %131 {approx = true} : vector<10x256xf32> -> vector<10x256xf32>
    %133 = arith.mulf %131, %132 : vector<10x256xf32>
    %cst_72 = arith.constant 2.000000e+00 : f32
    %134 = vector.broadcast %cst_72 : f32 to vector<10x256xf32>
    %135 = arith.subf %134, %133 : vector<10x256xf32>
    %136 = arith.mulf %132, %135 : vector<10x256xf32>
    %c0_73 = arith.constant 0 : index
    %c0_74 = arith.constant 0 : index
    %137 = vector.load %arg17[%c0_73, %c0_74] : memref<1x10xf32, #tpu.memory_space<vmem>>, vector<1x10xf32>
    %cst_75 = arith.constant dense<0.000000e+00> : vector<1x256xf32>
    %138 = tpu.matmul %137, %136, %cst_75 {dimension_numbers = #tpu.dot_dimension_numbers<[1], [0], [0], [1], [0, 0, 1, 1], [], []>} : vector<1x10xf32>, vector<10x256xf32>, vector<1x256xf32> -> vector<1x256xf32>
    %c0_76 = arith.constant 0 : index
    %c0_77 = arith.constant 0 : index
    %139 = vector.load %arg18[%c0_76, %c0_77] : memref<1x1xf32, #tpu.memory_space<vmem>>, vector<1x1xf32>
    %140 = vector.broadcast %139 : vector<1x1xf32> to vector<1x256xf32>
    %141 = arith.addf %138, %140 : vector<1x256xf32>
    %c0_78 = arith.constant 0 : index
    %c0_79 = arith.constant 0 : index
    %142 = vector.load %arg19[%c0_78, %c0_79] : memref<1x256xf32, #tpu.memory_space<vmem>>, vector<1x256xf32>
    tpu.vector_store %arg19[%c0_78, %c0_79], %141 {strides = array<i32>} : memref<1x256xf32, #tpu.memory_space<vmem>>, vector<1x256xf32>,
    return
  }
  func.func @transform_0(%arg0: i32) -> (i32, i32) {
    %c0_i32 = arith.constant 0 : i32
    %c0_i32_0 = arith.constant 0 : i32
    return %c0_i32, %arg0 : i32, i32
  }
  func.func @transform_1(%arg0: i32) -> (i32, i32) {
    %c0_i32 = arith.constant 0 : i32
    %c0_i32_0 = arith.constant 0 : i32
    %c0_i32_1 = arith.constant 0 : i32
    return %c0_i32, %c0_i32_0 : i32, i32
  }
  func.func @transform_2(%arg0: i32) -> (i32, i32) {
    %c0_i32 = arith.constant 0 : i32
    %c0_i32_0 = arith.constant 0 : i32
    %c0_i32_1 = arith.constant 0 : i32
    return %c0_i32, %c0_i32_0 : i32, i32
  }
  func.func @transform_3(%arg0: i32) -> (i32, i32) {
    %c0_i32 = arith.constant 0 : i32
    %c0_i32_0 = arith.constant 0 : i32
    %c0_i32_1 = arith.constant 0 : i32
    return %c0_i32, %c0_i32_0 : i32, i32
  }
  func.func @transform_4(%arg0: i32) -> (i32, i32) {
    %c0_i32 = arith.constant 0 : i32
    %c0_i32_0 = arith.constant 0 : i32
    %c0_i32_1 = arith.constant 0 : i32
    return %c0_i32, %c0_i32_0 : i32, i32
  }
  func.func @transform_5(%arg0: i32) -> (i32, i32) {
    %c0_i32 = arith.constant 0 : i32
    %c0_i32_0 = arith.constant 0 : i32
    %c0_i32_1 = arith.constant 0 : i32
    return %c0_i32, %c0_i32_0 : i32, i32
  }
  func.func @transform_6(%arg0: i32) -> (i32, i32) {
    %c0_i32 = arith.constant 0 : i32
    %c0_i32_0 = arith.constant 0 : i32
    %c0_i32_1 = arith.constant 0 : i32
    return %c0_i32, %c0_i32_0 : i32, i32
  }
  func.func @transform_7(%arg0: i32) -> (i32, i32) {
    %c0_i32 = arith.constant 0 : i32
    %c0_i32_0 = arith.constant 0 : i32
    %c0_i32_1 = arith.constant 0 : i32
    return %c0_i32, %c0_i32_0 : i32, i32
  }
  func.func @transform_8(%arg0: i32) -> (i32, i32) {
    %c0_i32 = arith.constant 0 : i32
    %c0_i32_0 = arith.constant 0 : i32
    %c0_i32_1 = arith.constant 0 : i32
    return %c0_i32, %c0_i32_0 : i32, i32
  }
  func.func @transform_9(%arg0: i32) -> (i32, i32) {
    %c0_i32 = arith.constant 0 : i32
    %c0_i32_0 = arith.constant 0 : i32
    %c0_i32_1 = arith.constant 0 : i32
    return %c0_i32, %c0_i32_0 : i32, i32
  }
  func.func @transform_10(%arg0: i32) -> (i32, i32) {
    %c0_i32 = arith.constant 0 : i32
    %c0_i32_0 = arith.constant 0 : i32
    %c0_i32_1 = arith.constant 0 : i32
    return %c0_i32, %c0_i32_0 : i32, i32
  }
  func.func @transform_11(%arg0: i32) -> (i32, i32) {
    %c0_i32 = arith.constant 0 : i32
    %c0_i32_0 = arith.constant 0 : i32
    %c0_i32_1 = arith.constant 0 : i32
    return %c0_i32, %c0_i32_0 : i32, i32
  }
  func.func @transform_12(%arg0: i32) -> (i32, i32) {
    %c0_i32 = arith.constant 0 : i32
    %c0_i32_0 = arith.constant 0 : i32
    %c0_i32_1 = arith.constant 0 : i32
    return %c0_i32, %c0_i32_0 : i32, i32
  }
  func.func @transform_13(%arg0: i32) -> (i32, i32) {
    %c0_i32 = arith.constant 0 : i32
    %c0_i32_0 = arith.constant 0 : i32
    %c0_i32_1 = arith.constant 0 : i32
    return %c0_i32, %c0_i32_0 : i32, i32
  }
  func.func @transform_14(%arg0: i32) -> (i32, i32) {
    %c0_i32 = arith.constant 0 : i32
    %c0_i32_0 = arith.constant 0 : i32
    %c0_i32_1 = arith.constant 0 : i32
    return %c0_i32, %c0_i32_0 : i32, i32
  }
  func.func @transform_15(%arg0: i32) -> (i32, i32) {
    %c0_i32 = arith.constant 0 : i32
    %c0_i32_0 = arith.constant 0 : i32
    %c0_i32_1 = arith.constant 0 : i32
    return %c0_i32, %c0_i32_0 : i32, i32
  }
  func.func @transform_16(%arg0: i32) -> (i32, i32) {
    %c0_i32 = arith.constant 0 : i32
    %c0_i32_0 = arith.constant 0 : i32
    %c0_i32_1 = arith.constant 0 : i32
    return %c0_i32, %c0_i32_0 : i32, i32
  }
  func.func @transform_17(%arg0: i32) -> (i32, i32) {
    %c0_i32 = arith.constant 0 : i32
    %c0_i32_0 = arith.constant 0 : i32
    %c0_i32_1 = arith.constant 0 : i32
    return %c0_i32, %c0_i32_0 : i32, i32
  }
  func.func @transform_18(%arg0: i32) -> (i32, i32) {
    %c0_i32 = arith.constant 0 : i32
    %c0_i32_0 = arith.constant 0 : i32
    return %c0_i32, %arg0 : i32, i32
  }
}

</mosaic_0001>

<llo_original>
// kernel: mlpsvy1x_forward.1
$region0: #{mlpsvy1x_forward.1}
  #allocation0 [shape = 'u32[]', space=smem, size = 0x4, offset = 0x4, fixed_abs, tag = 'smem constant byte address 0x4 - core index']
  #allocation1 [shape = 'u32[144,128]{1,0:T(1,128)}', space=vmem, size = 0x12000, scoped, tag = 'internal scratch']
  #allocation2 [shape = 'f32[1,1]{1,0:T(1,128)S(1)}', space=vmem, size = 0x200, scoped, tag = 'scoped memory for mlpsvy1x_forward.1']
  %s0 = inlined_call_operand.vmem [shape: f32[16,512], index: 0, kind: input, shape index: {}]
  %s1 = inlined_call_operand.vmem [shape: f32[32,16], index: 1, kind: input, shape index: {}]
  %s2 = inlined_call_operand.vmem [shape: f32[32,1], index: 2, kind: input, shape index: {}]
  %s3 = inlined_call_operand.vmem [shape: f32[24,32], index: 3, kind: input, shape index: {}]
  %s4 = inlined_call_operand.vmem [shape: f32[24,1], index: 4, kind: input, shape index: {}]
  %s5 = inlined_call_operand.vmem [shape: f32[8,24], index: 5, kind: input, shape index: {}]
  %s6 = inlined_call_operand.vmem [shape: f32[8,1], index: 6, kind: input, shape index: {}]
  %s7 = inlined_call_operand.vmem [shape: f32[6,24], index: 7, kind: input, shape index: {}]
  %s8 = inlined_call_operand.vmem [shape: f32[6,1], index: 8, kind: input, shape index: {}]
  %s9 = inlined_call_operand.vmem [shape: f32[20,8], index: 9, kind: input, shape index: {}]
  %s10 = inlined_call_operand.vmem [shape: f32[20,6], index: 10, kind: input, shape index: {}]
  %s11 = inlined_call_operand.vmem [shape: f32[20,1], index: 11, kind: input, shape index: {}]
  %s12 = inlined_call_operand.vmem [shape: f32[12,20], index: 12, kind: input, shape index: {}]
  %s13 = inlined_call_operand.vmem [shape: f32[12,1], index: 13, kind: input, shape index: {}]
  %s14 = inlined_call_operand.vmem [shape: f32[10,12], index: 14, kind: input, shape index: {}]
  %s15 = inlined_call_operand.vmem [shape: f32[10,1], index: 15, kind: input, shape index: {}]
  %s16 = inlined_call_operand.vmem [shape: f32[1,10], index: 16, kind: input, shape index: {}]
  %s17 = inlined_call_operand.<no memory space> [shape: f32[1,1], index: 17, kind: input, shape index: {}]
  %s18 = inlined_call_operand.hbm [shape: f32[1,512], index: 18, kind: output, shape index: {}]
  %s19 = sld [smem:[#allocation0]]
  $region128: #{mlpsvy1x_forward.1} parent=0
    _
  %s21 = ssub.s32 1, %s19
  %s22 = scalar_select 0, %s21, %s19
  %v23 = vstv %s17
  %24 = vst [vmem:[#allocation2] sm:$0x1] %v23
  $region1: #{mlpsvy1x_forward.1} parent=0
    #allocation3 [shape = 'u8[32768]{0}', space=vmem, size = 0x8000, scoped, tag = 'input window, operand 0']
    #allocation4 [shape = 'u8[2048]{0}', space=vmem, size = 0x800, scoped, tag = 'output window, operand 0']
    #allocation5 [shape = 's32[2]{0}', space=sflag, size = 0x8, scoped, tag = 'scoped memory for mlpsvy1x_forward.1']
    %25 = vsyncpa [#allocation5], 0
    %s26 = scalar_lea.sflag [#allocation5], 1
    %27 = vsyncpa %s26, 0
    loop: start=0, step=1, limit=4
    $region2: #{mlpsvy1x_forward.1} parent=1 // loop_pre_header
      _
    $region3: #{mlpsvy1x_forward.1} parent=1 // loop_header
      %s29 = sphi 0, %s33
      %p30 = scmp.ge.s32.totalorder %s29, 4
      %s39 = sphi 0, %s41
      %s42 = sphi 0, %s39
      %s43 = sphi 0, %s42
      %s59 = sphi 0, %s43
      %s63 = sphi 0, %s63
      %s65 = sphi 0, %s63
      %s66 = sphi 0, %s65
      %s80 = sphi 0, %s66
      %s84 = sphi 0, %s84
      %s86 = sphi 0, %s84
      %s87 = sphi 0, %s86
      %s101 = sphi 0, %s87
      %s105 = sphi 0, %s105
      %s107 = sphi 0, %s105
      %s108 = sphi 0, %s107
      %s122 = sphi 0, %s108
      %s126 = sphi 0, %s126
      %s128 = sphi 0, %s126
      %s129 = sphi 0, %s128
      %s143 = sphi 0, %s129
      %s147 = sphi 0, %s147
      %s149 = sphi 0, %s147
      %s150 = sphi 0, %s149
      %s164 = sphi 0, %s150
      %s168 = sphi 0, %s168
      %s170 = sphi 0, %s168
      %s171 = sphi 0, %s170
      %s185 = sphi 0, %s171
      %s189 = sphi 0, %s189
      %s191 = sphi 0, %s189
      %s192 = sphi 0, %s191
      %s206 = sphi 0, %s192
      %s210 = sphi 0, %s210
      %s212 = sphi 0, %s210
      %s213 = sphi 0, %s212
      %s227 = sphi 0, %s213
      %s231 = sphi 0, %s231
      %s233 = sphi 0, %s231
      %s234 = sphi 0, %s233
      %s248 = sphi 0, %s234
      %s252 = sphi 0, %s252
      %s254 = sphi 0, %s252
      %s255 = sphi 0, %s254
      %s269 = sphi 0, %s255
      %s273 = sphi 0, %s273
      %s275 = sphi 0, %s273
      %s276 = sphi 0, %s275
      %s290 = sphi 0, %s276
      %s294 = sphi 0, %s294
      %s296 = sphi 0, %s294
      %s297 = sphi 0, %s296
      %s311 = sphi 0, %s297
      %s315 = sphi 0, %s315
      %s317 = sphi 0, %s315
      %s318 = sphi 0, %s317
      %s332 = sphi 0, %s318
      %s336 = sphi 0, %s336
      %s338 = sphi 0, %s336
      %s339 = sphi 0, %s338
      %s353 = sphi 0, %s339
      %s357 = sphi 0, %s357
      %s359 = sphi 0, %s357
      %s360 = sphi 0, %s359
      %s374 = sphi 0, %s360
      %s378 = sphi 0, %s378
      %s380 = sphi 0, %s378
      %s381 = sphi 0, %s380
      %s395 = sphi 0, %s381
      %s399 = sphi 0, %s399
      %s401 = sphi 0, %s399
      %s402 = sphi 0, %s401
      %s416 = sphi 0, %s402
      %s422 = sphi 0, %s424
      %s425 = sphi 0, %s422
      %s426 = sphi 0, %s425
      %s442 = sphi 0, %s426
    $region4: #{mlpsvy1x_forward.1} parent=1 // loop_header_branch
      %32 = sbr.rel (%p30) target = $region8
    $region5: #{mlpsvy1x_forward.1} parent=1 // loop_body
      %s34 = ssub.s32 %s29, 1
      %s35 = ssub.s32 %s29, 2
      %s36 = sadd.s32 %s29, 1
      %s37 = ssub.s32 %s29, %s36
      %p38 = scmp.eq.s32.totalorder %s37, 0
      %s40 = sadd.s32 %s39, 1
      %s41 = scalar_select %p38, %s39, %s40
      %p44 = pneg %p38
      %p45 = scmp.eq.s32.totalorder %s29, 1
      %p46 = por %p44, %p45
      %p47 = scmp.ne.s32.totalorder %s39, %s42
      %p48 = scmp.eq.s32.totalorder %s29, 0
      %p49 = por %p47, %p48
      %p50 = scmp.ne.s32.totalorder %s39, %s42
      %p51 = scmp.eq.s32.totalorder %s34, 1
      %p52 = por %p50, %p51
      %p53 = scmp.ne.s32.totalorder %s42, %s43
      %p54 = scmp.eq.s32.totalorder %s34, 0
      %p55 = por %p53, %p54
      %p56 = scmp.ne.s32.totalorder %s42, %s43
      %p57 = scmp.eq.s32.totalorder %s35, 1
      %p58 = por %p56, %p57
      %p60 = scmp.ne.s32.totalorder %s43, %s59
      %p61 = scmp.eq.s32.totalorder %s35, 0
      %p62 = por %p60, %p61
      %s64 = sadd.s32 %s63, 1
      %p67 = scmp.eq.s32.totalorder %s29, 1
      %p68 = scmp.ne.s32.totalorder %s63, %s65
      %p69 = scmp.eq.s32.totalorder %s29, 0
      %p70 = por %p68, %p69
      %p71 = scmp.ne.s32.totalorder %s63, %s65
      %p72 = scmp.eq.s32.totalorder %s34, 1
      %p73 = por %p71, %p72
      %p74 = scmp.ne.s32.totalorder %s65, %s66
      %p75 = scmp.eq.s32.totalorder %s34, 0
      %p76 = por %p74, %p75
      %p77 = scmp.ne.s32.totalorder %s65, %s66
      %p78 = scmp.eq.s32.totalorder %s35, 1
      %p79 = por %p77, %p78
      %p81 = scmp.ne.s32.totalorder %s66, %s80
      %p82 = scmp.eq.s32.totalorder %s35, 0
      %p83 = por %p81, %p82
      %s85 = sadd.s32 %s84, 1
      %p88 = scmp.eq.s32.totalorder %s29, 1
      %p89 = scmp.ne.s32.totalorder %s84, %s86
      %p90 = scmp.eq.s32.totalorder %s29, 0
      %p91 = por %p89, %p90
      %p92 = scmp.ne.s32.totalorder %s84, %s86
      %p93 = scmp.eq.s32.totalorder %s34, 1
      %p94 = por %p92, %p93
      %p95 = scmp.ne.s32.totalorder %s86, %s87
      %p96 = scmp.eq.s32.totalorder %s34, 0
      %p97 = por %p95, %p96
      %p98 = scmp.ne.s32.totalorder %s86, %s87
      %p99 = scmp.eq.s32.totalorder %s35, 1
      %p100 = por %p98, %p99
      %p102 = scmp.ne.s32.totalorder %s87, %s101
      %p103 = scmp.eq.s32.totalorder %s35, 0
      %p104 = por %p102, %p103
      %s106 = sadd.s32 %s105, 1
      %p109 = scmp.eq.s32.totalorder %s29, 1
      %p110 = scmp.ne.s32.totalorder %s105, %s107
      %p111 = scmp.eq.s32.totalorder %s29, 0
      %p112 = por %p110, %p111
      %p113 = scmp.ne.s32.totalorder %s105, %s107
      %p114 = scmp.eq.s32.totalorder %s34, 1
      %p115 = por %p113, %p114
      %p116 = scmp.ne.s32.totalorder %s107, %s108
      %p117 = scmp.eq.s32.totalorder %s34, 0
      %p118 = por %p116, %p117
      %p119 = scmp.ne.s32.totalorder %s107, %s108
      %p120 = scmp.eq.s32.totalorder %s35, 1
      %p121 = por %p119, %p120
      %p123 = scmp.ne.s32.totalorder %s108, %s122
      %p124 = scmp.eq.s32.totalorder %s35, 0
      %p125 = por %p123, %p124
      %s127 = sadd.s32 %s126, 1
      %p130 = scmp.eq.s32.totalorder %s29, 1
      %p131 = scmp.ne.s32.totalorder %s126, %s128
      %p132 = scmp.eq.s32.totalorder %s29, 0
      %p133 = por %p131, %p132
      %p134 = scmp.ne.s32.totalorder %s126, %s128
      %p135 = scmp.eq.s32.totalorder %s34, 1
      %p136 = por %p134, %p135
      %p137 = scmp.ne.s32.totalorder %s128, %s129
      %p138 = scmp.eq.s32.totalorder %s34, 0
      %p139 = por %p137, %p138
      %p140 = scmp.ne.s32.totalorder %s128, %s129
      %p141 = scmp.eq.s32.totalorder %s35, 1
      %p142 = por %p140, %p141
      %p144 = scmp.ne.s32.totalorder %s129, %s143
      %p145 = scmp.eq.s32.totalorder %s35, 0
      %p146 = por %p144, %p145
      %s148 = sadd.s32 %s147, 1
      %p151 = scmp.eq.s32.totalorder %s29, 1
      %p152 = scmp.ne.s32.totalorder %s147, %s149
      %p153 = scmp.eq.s32.totalorder %s29, 0
      %p154 = por %p152, %p153
      %p155 = scmp.ne.s32.totalorder %s147, %s149
      %p156 = scmp.eq.s32.totalorder %s34, 1
      %p157 = por %p155, %p156
      %p158 = scmp.ne.s32.totalorder %s149, %s150
      %p159 = scmp.eq.s32.totalorder %s34, 0
      %p160 = por %p158, %p159
      %p161 = scmp.ne.s32.totalorder %s149, %s150
      %p162 = scmp.eq.s32.totalorder %s35, 1
      %p163 = por %p161, %p162
      %p165 = scmp.ne.s32.totalorder %s150, %s164
      %p166 = scmp.eq.s32.totalorder %s35, 0
      %p167 = por %p165, %p166
      %s169 = sadd.s32 %s168, 1
      %p172 = scmp.eq.s32.totalorder %s29, 1
      %p173 = scmp.ne.s32.totalorder %s168, %s170
      %p174 = scmp.eq.s32.totalorder %s29, 0
      %p175 = por %p173, %p174
      %p176 = scmp.ne.s32.totalorder %s168, %s170
      %p177 = scmp.eq.s32.totalorder %s34, 1
      %p178 = por %p176, %p177
      %p179 = scmp.ne.s32.totalorder %s170, %s171
      %p180 = scmp.eq.s32.totalorder %s34, 0
      %p181 = por %p179, %p180
      %p182 = scmp.ne.s32.totalorder %s170, %s171
      %p183 = scmp.eq.s32.totalorder %s35, 1
      %p184 = por %p182, %p183
      %p186 = scmp.ne.s32.totalorder %s171, %s185
      %p187 = scmp.eq.s32.totalorder %s35, 0
      %p188 = por %p186, %p187
      %s190 = sadd.s32 %s189, 1
      %p193 = scmp.eq.s32.totalorder %s29, 1
      %p194 = scmp.ne.s32.totalorder %s189, %s191
      %p195 = scmp.eq.s32.totalorder %s29, 0
      %p196 = por %p194, %p195
      %p197 = scmp.ne.s32.totalorder %s189, %s191
      %p198 = scmp.eq.s32.totalorder %s34, 1
      %p199 = por %p197, %p198
      %p200 = scmp.ne.s32.totalorder %s191, %s192
      %p201 = scmp.eq.s32.totalorder %s34, 0
      %p202 = por %p200, %p201
      %p203 = scmp.ne.s32.totalorder %s191, %s192
      %p204 = scmp.eq.s32.totalorder %s35, 1
      %p205 = por %p203, %p204
      %p207 = scmp.ne.s32.totalorder %s192, %s206
      %p208 = scmp.eq.s32.totalorder %s35, 0
      %p209 = por %p207, %p208
      %s211 = sadd.s32 %s210, 1
      %p214 = scmp.eq.s32.totalorder %s29, 1
      %p215 = scmp.ne.s32.totalorder %s210, %s212
      %p216 = scmp.eq.s32.totalorder %s29, 0
      %p217 = por %p215, %p216
      %p218 = scmp.ne.s32.totalorder %s210, %s212
      %p219 = scmp.eq.s32.totalorder %s34, 1
      %p220 = por %p218, %p219
      %p221 = scmp.ne.s32.totalorder %s212, %s213
      %p222 = scmp.eq.s32.totalorder %s34, 0
      %p223 = por %p221, %p222
      %p224 = scmp.ne.s32.totalorder %s212, %s213
      %p225 = scmp.eq.s32.totalorder %s35, 1
      %p226 = por %p224, %p225
      %p228 = scmp.ne.s32.totalorder %s213, %s227
      %p229 = scmp.eq.s32.totalorder %s35, 0
      %p230 = por %p228, %p229
      %s232 = sadd.s32 %s231, 1
      %p235 = scmp.eq.s32.totalorder %s29, 1
      %p236 = scmp.ne.s32.totalorder %s231, %s233
      %p237 = scmp.eq.s32.totalorder %s29, 0
      %p238 = por %p236, %p237
      %p239 = scmp.ne.s32.totalorder %s231, %s233
      %p240 = scmp.eq.s32.totalorder %s34, 1
      %p241 = por %p239, %p240
      %p242 = scmp.ne.s32.totalorder %s233, %s234
      %p243 = scmp.eq.s32.totalorder %s34, 0
      %p244 = por %p242, %p243
      %p245 = scmp.ne.s32.totalorder %s233, %s234
      %p246 = scmp.eq.s32.totalorder %s35, 1
      %p247 = por %p245, %p246
      %p249 = scmp.ne.s32.totalorder %s234, %s248
      %p250 = scmp.eq.s32.totalorder %s35, 0
      %p251 = por %p249, %p250
      %s253 = sadd.s32 %s252, 1
      %p256 = scmp.eq.s32.totalorder %s29, 1
      %p257 = scmp.ne.s32.totalorder %s252, %s254
      %p258 = scmp.eq.s32.totalorder %s29, 0
      %p259 = por %p257, %p258
      %p260 = scmp.ne.s32.totalorder %s252, %s254
      %p261 = scmp.eq.s32.totalorder %s34, 1
      %p262 = por %p260, %p261
      %p263 = scmp.ne.s32.totalorder %s254, %s255
      %p264 = scmp.eq.s32.totalorder %s34, 0
      %p265 = por %p263, %p264
      %p266 = scmp.ne.s32.totalorder %s254, %s255
      %p267 = scmp.eq.s32.totalorder %s35, 1
      %p268 = por %p266, %p267
      %p270 = scmp.ne.s32.totalorder %s255, %s269
      %p271 = scmp.eq.s32.totalorder %s35, 0
      %p272 = por %p270, %p271
      %s274 = sadd.s32 %s273, 1
      %p277 = scmp.eq.s32.totalorder %s29, 1
      %p278 = scmp.ne.s32.totalorder %s273, %s275
      %p279 = scmp.eq.s32.totalorder %s29, 0
      %p280 = por %p278, %p279
      %p281 = scmp.ne.s32.totalorder %s273, %s275
      %p282 = scmp.eq.s32.totalorder %s34, 1
      %p283 = por %p281, %p282
      %p284 = scmp.ne.s32.totalorder %s275, %s276
      %p285 = scmp.eq.s32.totalorder %s34, 0
      %p286 = por %p284, %p285
      %p287 = scmp.ne.s32.totalorder %s275, %s276
      %p288 = scmp.eq.s32.totalorder %s35, 1
      %p289 = por %p287, %p288
      %p291 = scmp.ne.s32.totalorder %s276, %s290
      %p292 = scmp.eq.s32.totalorder %s35, 0
      %p293 = por %p291, %p292
      %s295 = sadd.s32 %s294, 1
      %p298 = scmp.eq.s32.totalorder %s29, 1
      %p299 = scmp.ne.s32.totalorder %s294, %s296
      %p300 = scmp.eq.s32.totalorder %s29, 0
      %p301 = por %p299, %p300
      %p302 = scmp.ne.s32.totalorder %s294, %s296
      %p303 = scmp.eq.s32.totalorder %s34, 1
      %p304 = por %p302, %p303
      %p305 = scmp.ne.s32.totalorder %s296, %s297
      %p306 = scmp.eq.s32.totalorder %s34, 0
      %p307 = por %p305, %p306
      %p308 = scmp.ne.s32.totalorder %s296, %s297
      %p309 = scmp.eq.s32.totalorder %s35, 1
      %p310 = por %p308, %p309
      %p312 = scmp.ne.s32.totalorder %s297, %s311
      %p313 = scmp.eq.s32.totalorder %s35, 0
      %p314 = por %p312, %p313
      %s316 = sadd.s32 %s315, 1
      %p319 = scmp.eq.s32.totalorder %s29, 1
      %p320 = scmp.ne.s32.totalorder %s315, %s317
      %p321 = scmp.eq.s32.totalorder %s29, 0
      %p322 = por %p320, %p321
      %p323 = scmp.ne.s32.totalorder %s315, %s317
      %p324 = scmp.eq.s32.totalorder %s34, 1
      %p325 = por %p323, %p324
      %p326 = scmp.ne.s32.totalorder %s317, %s318
      %p327 = scmp.eq.s32.totalorder %s34, 0
      %p328 = por %p326, %p327
      %p329 = scmp.ne.s32.totalorder %s317, %s318
      %p330 = scmp.eq.s32.totalorder %s35, 1
      %p331 = por %p329, %p330
      %p333 = scmp.ne.s32.totalorder %s318, %s332
      %p334 = scmp.eq.s32.totalorder %s35, 0
      %p335 = por %p333, %p334
      %s337 = sadd.s32 %s336, 1
      %p340 = scmp.eq.s32.totalorder %s29, 1
      %p341 = scmp.ne.s32.totalorder %s336, %s338
      %p342 = scmp.eq.s32.totalorder %s29, 0
      %p343 = por %p341, %p342
      %p344 = scmp.ne.s32.totalorder %s336, %s338
      %p345 = scmp.eq.s32.totalorder %s34, 1
      %p346 = por %p344, %p345
      %p347 = scmp.ne.s32.totalorder %s338, %s339
      %p348 = scmp.eq.s32.totalorder %s34, 0
      %p349 = por %p347, %p348
      %p350 = scmp.ne.s32.totalorder %s338, %s339
      %p351 = scmp.eq.s32.totalorder %s35, 1
      %p352 = por %p350, %p351
      %p354 = scmp.ne.s32.totalorder %s339, %s353
      %p355 = scmp.eq.s32.totalorder %s35, 0
      %p356 = por %p354, %p355
      %s358 = sadd.s32 %s357, 1
      %p361 = scmp.eq.s32.totalorder %s29, 1
      %p362 = scmp.ne.s32.totalorder %s357, %s359
      %p363 = scmp.eq.s32.totalorder %s29, 0
      %p364 = por %p362, %p363
      %p365 = scmp.ne.s32.totalorder %s357, %s359
      %p366 = scmp.eq.s32.totalorder %s34, 1
      %p367 = por %p365, %p366
      %p368 = scmp.ne.s32.totalorder %s359, %s360
      %p369 = scmp.eq.s32.totalorder %s34, 0
      %p370 = por %p368, %p369
      %p371 = scmp.ne.s32.totalorder %s359, %s360
      %p372 = scmp.eq.s32.totalorder %s35, 1
      %p373 = por %p371, %p372
      %p375 = scmp.ne.s32.totalorder %s360, %s374
      %p376 = scmp.eq.s32.totalorder %s35, 0
      %p377 = por %p375, %p376
      %s379 = sadd.s32 %s378, 1
      %p382 = scmp.eq.s32.totalorder %s29, 1
      %p383 = scmp.ne.s32.totalorder %s378, %s380
      %p384 = scmp.eq.s32.totalorder %s29, 0
      %p385 = por %p383, %p384
      %p386 = scmp.ne.s32.totalorder %s378, %s380
      %p387 = scmp.eq.s32.totalorder %s34, 1
      %p388 = por %p386, %p387
      %p389 = scmp.ne.s32.totalorder %s380, %s381
      %p390 = scmp.eq.s32.totalorder %s34, 0
      %p391 = por %p389, %p390
      %p392 = scmp.ne.s32.totalorder %s380, %s381
      %p393 = scmp.eq.s32.totalorder %s35, 1
      %p394 = por %p392, %p393
      %p396 = scmp.ne.s32.totalorder %s381, %s395
      %p397 = scmp.eq.s32.totalorder %s35, 0
      %p398 = por %p396, %p397
      %s400 = sadd.s32 %s399, 1
      %p403 = scmp.eq.s32.totalorder %s29, 1
      %p404 = scmp.ne.s32.totalorder %s399, %s401
      %p405 = scmp.eq.s32.totalorder %s29, 0
      %p406 = por %p404, %p405
      %p407 = scmp.ne.s32.totalorder %s399, %s401
      %p408 = scmp.eq.s32.totalorder %s34, 1
      %p409 = por %p407, %p408
      %p410 = scmp.ne.s32.totalorder %s401, %s402
      %p411 = scmp.eq.s32.totalorder %s34, 0
      %p412 = por %p410, %p411
      %p413 = scmp.ne.s32.totalorder %s401, %s402
      %p414 = scmp.eq.s32.totalorder %s35, 1
      %p415 = por %p413, %p414
      %p417 = scmp.ne.s32.totalorder %s402, %s416
      %p418 = scmp.eq.s32.totalorder %s35, 0
      %p419 = por %p417, %p418
      %s420 = ssub.s32 %s29, %s36
      %p421 = scmp.eq.s32.totalorder %s420, 0
      %s423 = sadd.s32 %s422, 1
      %s424 = scalar_select %p421, %s422, %s423
      %p427 = pneg %p421
      %p428 = scmp.eq.s32.totalorder %s29, 1
      %p429 = por %p427, %p428
      %p430 = scmp.ne.s32.totalorder %s422, %s425
      %p431 = scmp.eq.s32.totalorder %s29, 0
      %p432 = por %p430, %p431
      %p433 = scmp.ne.s32.totalorder %s422, %s425
      %p434 = scmp.eq.s32.totalorder %s34, 1
      %p435 = por %p433, %p434
      %p436 = scmp.ne.s32.totalorder %s425, %s426
      %p437 = scmp.eq.s32.totalorder %s34, 0
      %p438 = por %p436, %p437
      %p439 = scmp.ne.s32.totalorder %s425, %s426
      %p440 = scmp.eq.s32.totalorder %s35, 1
      %p441 = por %p439, %p440
      %p443 = scmp.ne.s32.totalorder %s426, %s442
      %p444 = scmp.eq.s32.totalorder %s35, 0
      %p445 = por %p443, %p444
      %p446 = scmp.le.s32.totalorder 1, %s29
      %p447 = scmp.lt.s32.totalorder %s29, 3
      %p448 = pnand %p446, %p447
      %p449 = pneg %p448
      // Predicated region
      $region9: #{mlpsvy1x_forward.1} parent=5 // pred_check
        _
      $region10: #{mlpsvy1x_forward.1} parent=5 // pred_check_branch
        %451 = sbr.rel (%p448) target = $region12
      $region11: #{mlpsvy1x_forward.1} parent=5 // pred_region
        %s452 = ssub.s32 %s29, 1
        // Predicated region
        $region13: #{mlpsvy1x_forward.1} parent=11 // pred_check
          %p453 = pneg %p76
        $region14: #{mlpsvy1x_forward.1} parent=11 // pred_check_branch
          %455 = sbr.rel (%p453) target = $region16
        $region15: #{mlpsvy1x_forward.1} parent=11 // pred_region
          _
        $region16: #{mlpsvy1x_forward.1} parent=11 // pred_fallthru
          _
        // Predicated region
        $region17: #{mlpsvy1x_forward.1} parent=11 // pred_check
          %p456 = pneg %p97
        $region18: #{mlpsvy1x_forward.1} parent=11 // pred_check_branch
          %458 = sbr.rel (%p456) target = $region20
        $region19: #{mlpsvy1x_forward.1} parent=11 // pred_region
          _
        $region20: #{mlpsvy1x_forward.1} parent=11 // pred_fallthru
          _
        // Predicated region
        $region21: #{mlpsvy1x_forward.1} parent=11 // pred_check
          %p459 = pneg %p118
        $region22: #{mlpsvy1x_forward.1} parent=11 // pred_check_branch
          %461 = sbr.rel (%p459) target = $region24
        $region23: #{mlpsvy1x_forward.1} parent=11 // pred_region
          _
        $region24: #{mlpsvy1x_forward.1} parent=11 // pred_fallthru
          _
        // Predicated region
        $region25: #{mlpsvy1x_forward.1} parent=11 // pred_check
          %p462 = pneg %p139
        $region26: #{mlpsvy1x_forward.1} parent=11 // pred_check_branch
          %464 = sbr.rel (%p462) target = $region28
        $region27: #{mlpsvy1x_forward.1} parent=11 // pred_region
          _
        $region28: #{mlpsvy1x_forward.1} parent=11 // pred_fallthru
          _
        // Predicated region
        $region29: #{mlpsvy1x_forward.1} parent=11 // pred_check
          %p465 = pneg %p160
        $region30: #{mlpsvy1x_forward.1} parent=11 // pred_check_branch
          %467 = sbr.rel (%p465) target = $region32
        $region31: #{mlpsvy1x_forward.1} parent=11 // pred_region
          _
        $region32: #{mlpsvy1x_forward.1} parent=11 // pred_fallthru
          _
        // Predicated region
        $region33: #{mlpsvy1x_forward.1} parent=11 // pred_check
          %p468 = pneg %p181
        $region34: #{mlpsvy1x_forward.1} parent=11 // pred_check_branch
          %470 = sbr.rel (%p468) target = $region36
        $region35: #{mlpsvy1x_forward.1} parent=11 // pred_region
          _
        $region36: #{mlpsvy1x_forward.1} parent=11 // pred_fallthru
          _
        // Predicated region
        $region37: #{mlpsvy1x_forward.1} parent=11 // pred_check
          %p471 = pneg %p202
        $region38: #{mlpsvy1x_forward.1} parent=11 // pred_check_branch
          %473 = sbr.rel (%p471) target = $region40
        $region39: #{mlpsvy1x_forward.1} parent=11 // pred_region
          _
        $region40: #{mlpsvy1x_forward.1} parent=11 // pred_fallthru
          _
        // Predicated region
        $region41: #{mlpsvy1x_forward.1} parent=11 // pred_check
          %p474 = pneg %p223
        $region42: #{mlpsvy1x_forward.1} parent=11 // pred_check_branch
          %476 = sbr.rel (%p474) target = $region44
        $region43: #{mlpsvy1x_forward.1} parent=11 // pred_region
          _
        $region44: #{mlpsvy1x_forward.1} parent=11 // pred_fallthru
          _
        // Predicated region
        $region45: #{mlpsvy1x_forward.1} parent=11 // pred_check
          %p477 = pneg %p244
        $region46: #{mlpsvy1x_forward.1} parent=11 // pred_check_branch
          %479 = sbr.rel (%p477) target = $region48
        $region47: #{mlpsvy1x_forward.1} parent=11 // pred_region
          _
        $region48: #{mlpsvy1x_forward.1} parent=11 // pred_fallthru
          _
        // Predicated region
        $region49: #{mlpsvy1x_forward.1} parent=11 // pred_check
          %p480 = pneg %p265
        $region50: #{mlpsvy1x_forward.1} parent=11 // pred_check_branch
          %482 = sbr.rel (%p480) target = $region52
        $region51: #{mlpsvy1x_forward.1} parent=11 // pred_region
          _
        $region52: #{mlpsvy1x_forward.1} parent=11 // pred_fallthru
          _
        // Predicated region
        $region53: #{mlpsvy1x_forward.1} parent=11 // pred_check
          %p483 = pneg %p286
        $region54: #{mlpsvy1x_forward.1} parent=11 // pred_check_branch
          %485 = sbr.rel (%p483) target = $region56
        $region55: #{mlpsvy1x_forward.1} parent=11 // pred_region
          _
        $region56: #{mlpsvy1x_forward.1} parent=11 // pred_fallthru
          _
        // Predicated region
        $region57: #{mlpsvy1x_forward.1} parent=11 // pred_check
          %p486 = pneg %p307
        $region58: #{mlpsvy1x_forward.1} parent=11 // pred_check_branch
          %488 = sbr.rel (%p486) target = $region60
        $region59: #{mlpsvy1x_forward.1} parent=11 // pred_region
          _
        $region60: #{mlpsvy1x_forward.1} parent=11 // pred_fallthru
          _
        // Predicated region
        $region61: #{mlpsvy1x_forward.1} parent=11 // pred_check
          %p489 = pneg %p328
        $region62: #{mlpsvy1x_forward.1} parent=11 // pred_check_branch
          %491 = sbr.rel (%p489) target = $region64
        $region63: #{mlpsvy1x_forward.1} parent=11 // pred_region
          _
        $region64: #{mlpsvy1x_forward.1} parent=11 // pred_fallthru
          _
        // Predicated region
        $region65: #{mlpsvy1x_forward.1} parent=11 // pred_check
          %p492 = pneg %p349
        $region66: #{mlpsvy1x_forward.1} parent=11 // pred_check_branch
          %494 = sbr.rel (%p492) target = $region68
        $region67: #{mlpsvy1x_forward.1} parent=11 // pred_region
          _
        $region68: #{mlpsvy1x_forward.1} parent=11 // pred_fallthru
          _
        // Predicated region
        $region69: #{mlpsvy1x_forward.1} parent=11 // pred_check
          %p495 = pneg %p370
        $region70: #{mlpsvy1x_forward.1} parent=11 // pred_check_branch
          %497 = sbr.rel (%p495) target = $region72
        $region71: #{mlpsvy1x_forward.1} parent=11 // pred_region
          _
        $region72: #{mlpsvy1x_forward.1} parent=11 // pred_fallthru
          _
        // Predicated region
        $region73: #{mlpsvy1x_forward.1} parent=11 // pred_check
          %p498 = pneg %p391
        $region74: #{mlpsvy1x_forward.1} parent=11 // pred_check_branch
          %500 = sbr.rel (%p498) target = $region76
        $region75: #{mlpsvy1x_forward.1} parent=11 // pred_region
          _
        $region76: #{mlpsvy1x_forward.1} parent=11 // pred_fallthru
          _
        // Predicated region
        $region77: #{mlpsvy1x_forward.1} parent=11 // pred_check
          %p501 = pneg %p412
        $region78: #{mlpsvy1x_forward.1} parent=11 // pred_check_branch
          %503 = sbr.rel (%p501) target = $region80
        $region79: #{mlpsvy1x_forward.1} parent=11 // pred_region
          _
        $region80: #{mlpsvy1x_forward.1} parent=11 // pred_fallthru
          _
      $region12: #{mlpsvy1x_forward.1} parent=5 // pred_fallthru
        _
      %p504 = scmp.lt.s32.totalorder %s29, 2
      // Predicated region
      $region81: #{mlpsvy1x_forward.1} parent=5 // pred_check
        %p505 = pneg %p504
      $region82: #{mlpsvy1x_forward.1} parent=5 // pred_check_branch
        %507 = sbr.rel (%p505) target = $region84
      $region83: #{mlpsvy1x_forward.1} parent=5 // pred_region
        // Predicated region
        $region85: #{mlpsvy1x_forward.1} parent=83 // pred_check
          %p508 = pneg %p49
        $region86: #{mlpsvy1x_forward.1} parent=83 // pred_check_branch
          %510 = sbr.rel (%p508) target = $region88
        $region87: #{mlpsvy1x_forward.1} parent=83 // pred_region
          %s511 = sand.u32 %s39, 1
          %s512 = sand.u32 %s39, 1
          %s513 = smul.addr %s512, 32
          %s514 = scalar_lea.vmem [#allocation3], %s513
          %s515 = smul.u32 2, %s29
          %s516 = smul.addr %s515, 8
          %s517 = scalar_lea.vmem %s0, %s516
          // Predicated region
          $region89: #{mlpsvy1x_forward.1} parent=87 // pred_check
            _
          $region90: #{mlpsvy1x_forward.1} parent=87 // pred_check_branch
            %519 = sbr.rel (0) target = $region92
          $region91: #{mlpsvy1x_forward.1} parent=87 // pred_region
            // Predicated region
            $region93: #{mlpsvy1x_forward.1} parent=91 // pred_check
              _
            $region94: #{mlpsvy1x_forward.1} parent=91 // pred_check_branch
              %521 = sbr.rel (0) target = $region96
            $region95: #{mlpsvy1x_forward.1} parent=91 // pred_region
              loop: start=0, step=1, limit=1
              $region97: #{mlpsvy1x_forward.1} parent=95 // loop_pre_header
                _
              $region98: #{mlpsvy1x_forward.1} parent=95 // loop_header
                %s523 = sphi 0, %s527
                %p524 = scmp.ge.s32.totalorder %s523, 1
                %s528 = sphi %s517, %s517
                %s529 = sphi %s514, %s514
              $region99: #{mlpsvy1x_forward.1} parent=95 // loop_header_branch
                %526 = sbr.rel (%p524) target = $region103
              $region100: #{mlpsvy1x_forward.1} parent=95 // loop_body
                %v530 = vld [vmem:[%s528] sm:$0xff]
                %531 = vst [vmem:[%s529] sm:$0xff] %v530
                %v532 = vld [vmem:[%s528 + $0x8] sm:$0xff]
                %533 = vst [vmem:[%s529 + $0x8] sm:$0xff] %v532
                %v534 = vld [vmem:[%s528 + $0x20] sm:$0xff]
                %535 = vst [vmem:[%s529 + $0x10] sm:$0xff] %v534
                %v536 = vld [vmem:[%s528 + $0x28] sm:$0xff]
                %537 = vst [vmem:[%s529 + $0x18] sm:$0xff] %v536
              $region101: #{mlpsvy1x_forward.1} parent=95 // loop_footer
                %s527 = sadd.s32 1, %s523
              $region102: #{mlpsvy1x_forward.1} parent=95 // loop_footer_branch
                %522 = sbr.rel target = $region98
              $region103: #{mlpsvy1x_forward.1} parent=95 // loop_exit
                _
            $region96: #{mlpsvy1x_forward.1} parent=91 // pred_fallthru
              _
            // Predicated region
            $region104: #{mlpsvy1x_forward.1} parent=91 // pred_check
              _
            $region105: #{mlpsvy1x_forward.1} parent=91 // pred_check_branch
              %539 = sbr.rel target = $region107
            $region106: #{mlpsvy1x_forward.1} parent=91 // pred_region
              _
            $region107: #{mlpsvy1x_forward.1} parent=91 // pred_fallthru
              _
          $region92: #{mlpsvy1x_forward.1} parent=87 // pred_fallthru
            _
          %540 = vnop
        $region88: #{mlpsvy1x_forward.1} parent=83 // pred_fallthru
          _
      $region84: #{mlpsvy1x_forward.1} parent=5 // pred_fallthru
        _
      %p541 = scmp.le.s32.totalorder 1, %s29
      %p542 = scmp.lt.s32.totalorder %s29, 3
      %p543 = pnand %p541, %p542
      %p544 = pneg %p543
      // Predicated region
      $region108: #{mlpsvy1x_forward.1} parent=5 // pred_check
        _
      $region109: #{mlpsvy1x_forward.1} parent=5 // pred_check_branch
        %546 = sbr.rel (%p543) target = $region111
      $region110: #{mlpsvy1x_forward.1} parent=5 // pred_region
        %s547 = ssub.s32 %s29, 1
        %s548 = sand.u32 %s42, 1
        %s549 = sand.u32 %s42, 1
        %s550 = smul.addr %s549, 32
        %s551 = scalar_lea.vmem [#allocation3], %s550
        // Predicated region
        $region112: #{mlpsvy1x_forward.1} parent=110 // pred_check
          %p552 = pneg %p55
        $region113: #{mlpsvy1x_forward.1} parent=110 // pred_check_branch
          %554 = sbr.rel (%p552) target = $region115
        $region114: #{mlpsvy1x_forward.1} parent=110 // pred_region
          _
        $region115: #{mlpsvy1x_forward.1} parent=110 // pred_fallthru
          _
        %s555 = sand.u32 %s42, 1
        %s556 = sand.u32 %s42, 1
        %s557 = smul.addr %s556, 32
        %s558 = scalar_lea.vmem [#allocation3], %s557
        %p559 = pneg %p55
        %p560 = pneg %p52
        %p561 = pneg %p76
        %p562 = pneg %p73
        %p563 = pneg %p97
        %p564 = pneg %p94
        %p565 = pneg %p118
        %p566 = pneg %p115
        %p567 = pneg %p139
        %p568 = pneg %p136
        %p569 = pneg %p160
        %p570 = pneg %p157
        %p571 = pneg %p181
        %p572 = pneg %p178
        %p573 = pneg %p202
        %p574 = pneg %p199
        %p575 = pneg %p223
        %p576 = pneg %p220
        %p577 = pneg %p244
        %p578 = pneg %p241
        %p579 = pneg %p265
        %p580 = pneg %p262
        %p581 = pneg %p286
        %p582 = pneg %p283
        %p583 = pneg %p307
        %p584 = pneg %p304
        %p585 = pneg %p328
        %p586 = pneg %p325
        %p587 = pneg %p349
        %p588 = pneg %p346
        %p589 = pneg %p370
        %p590 = pneg %p367
        %p591 = pneg %p391
        %p592 = pneg %p388
        %p593 = pneg %p412
        %p594 = pneg %p409
        %p595 = pneg %p438
        %p596 = pneg %p435
        %s597 = sand.u32 %s425, 1
        %s598 = scalar_lea.sflag [#allocation5], %s597
        %s599 = sand.u32 %s425, 1
        %s600 = smul.addr %s599, 2
        %s601 = scalar_lea.vmem [#allocation4], %s600
        %s602 = smul.u32 2, %s34
        %s603 = smul.u32 2, %s34
        %v604 = vld [vmem:[%s551] sm:$0xff]
        %v605 = vld [vmem:[%s551 + $0x8] sm:$0xff]
        %v606 = vld [vmem:[%s551 + $0x10] sm:$0xff]
        %v607 = vld [vmem:[%s551 + $0x18] sm:$0xff]
        %v608 = vld [vmem:[%s1] sm:$0xff]
        %v609 = vld [vmem:[%s1 + $0x8] sm:$0xff]
        %v610 = vld [vmem:[%s1 + $0x10] sm:$0xff]
        %v611 = vld [vmem:[%s1 + $0x18] sm:$0xff]
        %v612 = vld [vmem:[%s2] sm:$0xff]
        %v613 = vld [vmem:[%s2 + $0x8] sm:$0xff]
        %v614 = vld [vmem:[%s2 + $0x10] sm:$0xff]
        %v615 = vld [vmem:[%s2 + $0x18] sm:$0xff]
        %617 = vset.pattern.permute.xlu0 0
        %618 = vperm.xlu0 %617, %v612
        %v619 = vpop.permute.xlu0 %618
        %622 = vset.pattern.permute.xlu0 0
        %623 = vperm.xlu0 %622, %v613
        %v624 = vpop.permute.xlu0 %623
        %627 = vset.pattern.permute.xlu0 0
        %628 = vperm.xlu0 %627, %v614
        %v629 = vpop.permute.xlu0 %628
        %632 = vset.pattern.permute.xlu0 0
        %633 = vperm.xlu0 %632, %v615
        %v634 = vpop.permute.xlu0 %633
        %vm636 = vcmask 130048
        %v638 = vsel %vm636, %v608, 0
        %v641 = vsel %vm636, %v609, 0
        %v644 = vsel %vm636, %v610, 0
        %v647 = vsel %vm636, %v611, 0
        %649 = vmatprep.subr.mxu0 0.0
        %650 = vmatpush1.msra.mxu0 0.0
        %651 = vmatprep.subr.mxu0 0.0
        %652 = vmatpush1.msra.mxu0 0.0
        %653 = vmatprep.subr.mxu0 0.0
        %654 = vmatpush1.msra.mxu0 0.0
        %655 = vmatprep.subr.mxu0 0.0
        %656 = vmatpush1.msra.mxu0 0.0
        %657 = vmatprep.subr.mxu0 0.0
        %658 = vmatpush1.msra.mxu0 0.0
        %659 = vmatprep.subr.mxu0 0.0
        %660 = vmatpush1.msra.mxu0 0.0
        %661 = vmatprep.subr.mxu0 0.0
        %662 = vmatpush1.msra.mxu0 0.0
        %663 = vmatprep.subr.mxu0 0.0
        %664 = vmatpush1.msra.mxu0 0.0
        %665 = vmatprep.subr.mxu0 0.0
        %666 = vmatpush1.msra.mxu0 0.0
        %667 = vmatprep.subr.mxu0 0.0
        %668 = vmatpush1.msra.mxu0 0.0
        %669 = vmatprep.subr.mxu0 0.0
        %670 = vmatpush1.msra.mxu0 0.0
        %671 = vmatprep.subr.mxu0 0.0
        %672 = vmatpush1.msra.mxu0 0.0
        %673 = vmatprep.subr.mxu0 0.0
        %674 = vmatpush1.msra.mxu0 0.0
        %675 = vmatprep.subr.mxu0 0.0
        %676 = vmatpush1.msra.mxu0 0.0
        %677 = vmatprep.subr.mxu0 %v607
        %678 = vmatpush1.msra.mxu0 %v606
        %679 = vmatprep.subr.mxu0 %v605
        %680 = vmatpush1.msra.mxu0 %v604
        %681 = vmatprep.subr.mxu0 0.0
        %682 = vmatpush2.msra.mxu0 0.0
        %683 = vmatprep.subr.mxu0 0.0
        %684 = vmatpush2.msra.mxu0 0.0
        %685 = vmatprep.subr.mxu0 0.0
        %686 = vmatpush2.msra.mxu0 0.0
        %687 = vmatprep.subr.mxu0 0.0
        %688 = vmatpush2.msra.mxu0 0.0
        %689 = vmatprep.subr.mxu0 0.0
        %690 = vmatpush2.msra.mxu0 0.0
        %691 = vmatprep.subr.mxu0 0.0
        %692 = vmatpush2.msra.mxu0 0.0
        %693 = vmatprep.subr.mxu0 0.0
        %694 = vmatpush2.msra.mxu0 0.0
        %695 = vmatprep.subr.mxu0 0.0
        %696 = vmatpush2.msra.mxu0 0.0
        %697 = vmatprep.subr.mxu0 0.0
        %698 = vmatpush2.msra.mxu0 0.0
        %699 = vmatprep.subr.mxu0 0.0
        %700 = vmatpush2.msra.mxu0 0.0
        %701 = vmatprep.subr.mxu0 0.0
        %702 = vmatpush2.msra.mxu0 0.0
        %703 = vmatprep.subr.mxu0 0.0
        %704 = vmatpush2.msra.mxu0 0.0
        %705 = vmatprep.subr.mxu0 0.0
        %706 = vmatpush2.msra.mxu0 0.0
        %707 = vmatprep.subr.mxu0 0.0
        %708 = vmatpush2.msra.mxu0 0.0
        %709 = vmatprep.subr.mxu0 0.0
        %710 = vmatpush2.msra.mxu0 0.0
        %711 = vmatprep.subr.mxu0 0.0
        %712 = vmatpush2.msra.mxu0 0.0
        %713 = vmatprep.mubr.f32.mxu0 0.0
        %714 = vmatmul.mubr.f32.gmra.mxu0 %v638
        %v715 = vpop.f32.mrf.mxu0
        %v716 = vadd.f32 %v619, %v715
        %v717 = vpop.f32.mrf.mxu0
        %v718 = vadd.f32 %v619, %v717
        %719 = vmatprep.mubr.f32.mxu0 0.0
        %720 = vmatmul.mubr.f32.gmra.mxu0 %v641
        %v721 = vpop.f32.mrf.mxu0
        %v722 = vadd.f32 %v624, %v721
        %v723 = vpop.f32.mrf.mxu0
        %v724 = vadd.f32 %v624, %v723
        %725 = vmatprep.mubr.f32.mxu0 0.0
        %726 = vmatmul.mubr.f32.gmra.mxu0 %v644
        %v727 = vpop.f32.mrf.mxu0
        %v728 = vadd.f32 %v629, %v727
        %v729 = vpop.f32.mrf.mxu0
        %v730 = vadd.f32 %v629, %v729
        %731 = vmatprep.mubr.f32.mxu0 0.0
        %732 = vmatmul.mubr.f32.gmra.mxu0 %v647
        %v733 = vpop.f32.mrf.mxu0
        %v734 = vadd.f32 %v634, %v733
        %v735 = vpop.f32.mrf.mxu0
        %v736 = vadd.f32 %v634, %v735
        %737 = vdwg.mxu0
        %v738 = vmax.f32 %v716, -30.0
        %v739 = vmax.f32 %v718, -30.0
        %v740 = vmax.f32 %v722, -30.0
        %v741 = vmax.f32 %v724, -30.0
        %v742 = vmax.f32 %v728, -30.0
        %v743 = vmax.f32 %v730, -30.0
        %v744 = vmax.f32 %v734, -30.0
        %v745 = vmax.f32 %v736, -30.0
        %v746 = vmin.f32 %v738, 30.0
        %v747 = vmin.f32 %v739, 30.0
        %v748 = vmin.f32 %v740, 30.0
        %v749 = vmin.f32 %v741, 30.0
        %v750 = vmin.f32 %v742, 30.0
        %v751 = vmin.f32 %v743, 30.0
        %v752 = vmin.f32 %v744, 30.0
        %v753 = vmin.f32 %v745, 30.0
        %v754 = vsub.f32 0.0, %v746
        %v755 = vsub.f32 0.0, %v747
        %v756 = vsub.f32 0.0, %v748
        %v757 = vsub.f32 0.0, %v749
        %v758 = vsub.f32 0.0, %v750
        %v759 = vsub.f32 0.0, %v751
        %v760 = vsub.f32 0.0, %v752
        %v761 = vsub.f32 0.0, %v753
        %v762 = vmul.f32 %v754, 1.442695
        %v763 = vpow.pop %v762
        %v764 = vmul.f32 %v755, 1.442695
        %v765 = vpow.pop %v764
        %v766 = vmul.f32 %v756, 1.442695
        %v767 = vpow.pop %v766
        %v768 = vmul.f32 %v757, 1.442695
        %v769 = vpow.pop %v768
        %v770 = vmul.f32 %v758, 1.442695
        %v771 = vpow.pop %v770
        %v772 = vmul.f32 %v759, 1.442695
        %v773 = vpow.pop %v772
        %v774 = vmul.f32 %v760, 1.442695
        %v775 = vpow.pop %v774
        %v776 = vmul.f32 %v761, 1.442695
        %v777 = vpow.pop %v776
        %v778 = vadd.f32 %v763, 1.0
        %v779 = vadd.f32 %v765, 1.0
        %v780 = vadd.f32 %v767, 1.0
        %v781 = vadd.f32 %v769, 1.0
        %v782 = vadd.f32 %v771, 1.0
        %v783 = vadd.f32 %v773, 1.0
        %v784 = vadd.f32 %v775, 1.0
        %v785 = vadd.f32 %v777, 1.0
        %v786 = vrcp.pop %v778
        %v787 = vrcp.pop %v779
        %v788 = vrcp.pop %v780
        %v789 = vrcp.pop %v781
        %v790 = vrcp.pop %v782
        %v791 = vrcp.pop %v783
        %v792 = vrcp.pop %v784
        %v793 = vrcp.pop %v785
        %v794 = vmul.f32 %v778, %v786
        %v795 = vmul.f32 %v779, %v787
        %v796 = vmul.f32 %v780, %v788
        %v797 = vmul.f32 %v781, %v789
        %v798 = vmul.f32 %v782, %v790
        %v799 = vmul.f32 %v783, %v791
        %v800 = vmul.f32 %v784, %v792
        %v801 = vmul.f32 %v785, %v793
        %v802 = vsub.f32 2.0, %v794
        %v803 = vsub.f32 2.0, %v795
        %v804 = vsub.f32 2.0, %v796
        %v805 = vsub.f32 2.0, %v797
        %v806 = vsub.f32 2.0, %v798
        %v807 = vsub.f32 2.0, %v799
        %v808 = vsub.f32 2.0, %v800
        %v809 = vsub.f32 2.0, %v801
        %v810 = vmul.f32 %v786, %v802
        %v811 = vmul.f32 %v787, %v803
        %v812 = vmul.f32 %v788, %v804
        %v813 = vmul.f32 %v789, %v805
        %v814 = vmul.f32 %v790, %v806
        %v815 = vmul.f32 %v791, %v807
        %v816 = vmul.f32 %v792, %v808
        %v817 = vmul.f32 %v793, %v809
        %v818 = vld [vmem:[%s3] sm:$0xff]
        %v819 = vld [vmem:[%s3 + $0x8] sm:$0xff]
        %v820 = vld [vmem:[%s3 + $0x10] sm:$0xff]
        %v821 = vld [vmem:[%s4] sm:$0xff]
        %v822 = vld [vmem:[%s4 + $0x8] sm:$0xff]
        %v823 = vld [vmem:[%s4 + $0x10] sm:$0xff]
        %825 = vset.pattern.permute.xlu0 0
        %826 = vperm.xlu0 %825, %v821
        %v827 = vpop.permute.xlu0 %826
        %830 = vset.pattern.permute.xlu0 0
        %831 = vperm.xlu0 %830, %v822
        %v832 = vpop.permute.xlu0 %831
        %835 = vset.pattern.permute.xlu0 0
        %836 = vperm.xlu0 %835, %v823
        %v837 = vpop.permute.xlu0 %836
        %vm839 = vcmask 261120
        %v841 = vsel %vm839, %v818, 0
        %v844 = vsel %vm839, %v819, 0
        %v847 = vsel %vm839, %v820, 0
        %849 = vmatprep.subr.mxu0 0.0
        %850 = vmatpush1.msra.mxu0 0.0
        %851 = vmatprep.subr.mxu0 0.0
        %852 = vmatpush1.msra.mxu0 0.0
        %853 = vmatprep.subr.mxu0 0.0
        %854 = vmatpush1.msra.mxu0 0.0
        %855 = vmatprep.subr.mxu0 0.0
        %856 = vmatpush1.msra.mxu0 0.0
        %857 = vmatprep.subr.mxu0 0.0
        %858 = vmatpush1.msra.mxu0 0.0
        %859 = vmatprep.subr.mxu0 0.0
        %860 = vmatpush1.msra.mxu0 0.0
        %861 = vmatprep.subr.mxu0 0.0
        %862 = vmatpush1.msra.mxu0 0.0
        %863 = vmatprep.subr.mxu0 0.0
        %864 = vmatpush1.msra.mxu0 0.0
        %865 = vmatprep.subr.mxu0 0.0
        %866 = vmatpush1.msra.mxu0 0.0
        %867 = vmatprep.subr.mxu0 0.0
        %868 = vmatpush1.msra.mxu0 0.0
        %869 = vmatprep.subr.mxu0 0.0
        %870 = vmatpush1.msra.mxu0 0.0
        %871 = vmatprep.subr.mxu0 0.0
        %872 = vmatpush1.msra.mxu0 0.0
        %873 = vmatprep.subr.mxu0 %v817
        %874 = vmatpush1.msra.mxu0 %v816
        %875 = vmatprep.subr.mxu0 %v815
        %876 = vmatpush1.msra.mxu0 %v814
        %877 = vmatprep.subr.mxu0 %v813
        %878 = vmatpush1.msra.mxu0 %v812
        %879 = vmatprep.subr.mxu0 %v811
        %880 = vmatpush1.msra.mxu0 %v810
        %881 = vmatprep.subr.mxu0 0.0
        %882 = vmatpush2.msra.mxu0 0.0
        %883 = vmatprep.subr.mxu0 0.0
        %884 = vmatpush2.msra.mxu0 0.0
        %885 = vmatprep.subr.mxu0 0.0
        %886 = vmatpush2.msra.mxu0 0.0
        %887 = vmatprep.subr.mxu0 0.0
        %888 = vmatpush2.msra.mxu0 0.0
        %889 = vmatprep.subr.mxu0 0.0
        %890 = vmatpush2.msra.mxu0 0.0
        %891 = vmatprep.subr.mxu0 0.0
        %892 = vmatpush2.msra.mxu0 0.0
        %893 = vmatprep.subr.mxu0 0.0
        %894 = vmatpush2.msra.mxu0 0.0
        %895 = vmatprep.subr.mxu0 0.0
        %896 = vmatpush2.msra.mxu0 0.0
        %897 = vmatprep.subr.mxu0 0.0
        %898 = vmatpush2.msra.mxu0 0.0
        %899 = vmatprep.subr.mxu0 0.0
        %900 = vmatpush2.msra.mxu0 0.0
        %901 = vmatprep.subr.mxu0 0.0
        %902 = vmatpush2.msra.mxu0 0.0
        %903 = vmatprep.subr.mxu0 0.0
        %904 = vmatpush2.msra.mxu0 0.0
        %905 = vmatprep.subr.mxu0 0.0
        %906 = vmatpush2.msra.mxu0 0.0
        %907 = vmatprep.subr.mxu0 0.0
        %908 = vmatpush2.msra.mxu0 0.0
        %909 = vmatprep.subr.mxu0 0.0
        %910 = vmatpush2.msra.mxu0 0.0
        %911 = vmatprep.subr.mxu0 0.0
        %912 = vmatpush2.msra.mxu0 0.0
        %913 = vmatprep.mubr.f32.mxu0 0.0
        %914 = vmatmul.mubr.f32.gmra.mxu0 %v841
        %v915 = vpop.f32.mrf.mxu0
        %v916 = vadd.f32 %v827, %v915
        %v917 = vpop.f32.mrf.mxu0
        %v918 = vadd.f32 %v827, %v917
        %919 = vmatprep.mubr.f32.mxu0 0.0
        %920 = vmatmul.mubr.f32.gmra.mxu0 %v844
        %v921 = vpop.f32.mrf.mxu0
        %v922 = vadd.f32 %v832, %v921
        %v923 = vpop.f32.mrf.mxu0
        %v924 = vadd.f32 %v832, %v923
        %925 = vmatprep.mubr.f32.mxu0 0.0
        %926 = vmatmul.mubr.f32.gmra.mxu0 %v847
        %v927 = vpop.f32.mrf.mxu0
        %v928 = vadd.f32 %v837, %v927
        %v929 = vpop.f32.mrf.mxu0
        %v930 = vadd.f32 %v837, %v929
        %931 = vdwg.mxu0
        %v932 = vmax.f32 %v916, -30.0
        %v933 = vmax.f32 %v918, -30.0
        %v934 = vmax.f32 %v922, -30.0
        %v935 = vmax.f32 %v924, -30.0
        %v936 = vmax.f32 %v928, -30.0
        %v937 = vmax.f32 %v930, -30.0
        %v938 = vmin.f32 %v932, 30.0
        %v939 = vmin.f32 %v933, 30.0
        %v940 = vmin.f32 %v934, 30.0
        %v941 = vmin.f32 %v935, 30.0
        %v942 = vmin.f32 %v936, 30.0
        %v943 = vmin.f32 %v937, 30.0
        %v944 = vsub.f32 0.0, %v938
        %v945 = vsub.f32 0.0, %v939
        %v946 = vsub.f32 0.0, %v940
        %v947 = vsub.f32 0.0, %v941
        %v948 = vsub.f32 0.0, %v942
        %v949 = vsub.f32 0.0, %v943
        %v950 = vmul.f32 %v944, 1.442695
        %v951 = vpow.pop %v950
        %v952 = vmul.f32 %v945, 1.442695
        %v953 = vpow.pop %v952
        %v954 = vmul.f32 %v946, 1.442695
        %v955 = vpow.pop %v954
        %v956 = vmul.f32 %v947, 1.442695
        %v957 = vpow.pop %v956
        %v958 = vmul.f32 %v948, 1.442695
        %v959 = vpow.pop %v958
        %v960 = vmul.f32 %v949, 1.442695
        %v961 = vpow.pop %v960
        %v962 = vadd.f32 %v951, 1.0
        %v963 = vadd.f32 %v953, 1.0
        %v964 = vadd.f32 %v955, 1.0
        %v965 = vadd.f32 %v957, 1.0
        %v966 = vadd.f32 %v959, 1.0
        %v967 = vadd.f32 %v961, 1.0
        %v968 = vrcp.pop %v962
        %v969 = vrcp.pop %v963
        %v970 = vrcp.pop %v964
        %v971 = vrcp.pop %v965
        %v972 = vrcp.pop %v966
        %v973 = vrcp.pop %v967
        %v974 = vmul.f32 %v962, %v968
        %v975 = vmul.f32 %v963, %v969
        %v976 = vmul.f32 %v964, %v970
        %v977 = vmul.f32 %v965, %v971
        %v978 = vmul.f32 %v966, %v972
        %v979 = vmul.f32 %v967, %v973
        %v980 = vsub.f32 2.0, %v974
        %v981 = vsub.f32 2.0, %v975
        %v982 = vsub.f32 2.0, %v976
        %v983 = vsub.f32 2.0, %v977
        %v984 = vsub.f32 2.0, %v978
        %v985 = vsub.f32 2.0, %v979
        %v986 = vmul.f32 %v968, %v980
        %v987 = vmul.f32 %v969, %v981
        %v988 = vmul.f32 %v970, %v982
        %v989 = vmul.f32 %v971, %v983
        %v990 = vmul.f32 %v972, %v984
        %v991 = vmul.f32 %v973, %v985
        %v992 = vld [vmem:[%s5] sm:$0xff]
        %v993 = vld [vmem:[%s6] sm:$0xff]
        %995 = vset.pattern.permute.xlu0 0
        %996 = vperm.xlu0 %995, %v993
        %v997 = vpop.permute.xlu0 %996
        %vm999 = vcmask 195584
        %v1001 = vsel %vm999, %v992, 0
        %1003 = vmatprep.subr.mxu0 0.0
        %1004 = vmatpush1.msra.mxu0 0.0
        %1005 = vmatprep.subr.mxu0 0.0
        %1006 = vmatpush1.msra.mxu0 0.0
        %1007 = vmatprep.subr.mxu0 0.0
        %1008 = vmatpush1.msra.mxu0 0.0
        %1009 = vmatprep.subr.mxu0 0.0
        %1010 = vmatpush1.msra.mxu0 0.0
        %1011 = vmatprep.subr.mxu0 0.0
        %1012 = vmatpush1.msra.mxu0 0.0
        %1013 = vmatprep.subr.mxu0 0.0
        %1014 = vmatpush1.msra.mxu0 0.0
        %1015 = vmatprep.subr.mxu0 0.0
        %1016 = vmatpush1.msra.mxu0 0.0
        %1017 = vmatprep.subr.mxu0 0.0
        %1018 = vmatpush1.msra.mxu0 0.0
        %1019 = vmatprep.subr.mxu0 0.0
        %1020 = vmatpush1.msra.mxu0 0.0
        %1021 = vmatprep.subr.mxu0 0.0
        %1022 = vmatpush1.msra.mxu0 0.0
        %1023 = vmatprep.subr.mxu0 0.0
        %1024 = vmatpush1.msra.mxu0 0.0
        %1025 = vmatprep.subr.mxu0 0.0
        %1026 = vmatpush1.msra.mxu0 0.0
        %1027 = vmatprep.subr.mxu0 0.0
        %1028 = vmatpush1.msra.mxu0 0.0
        %1029 = vmatprep.subr.mxu0 %v991
        %1030 = vmatpush1.msra.mxu0 %v990
        %1031 = vmatprep.subr.mxu0 %v989
        %1032 = vmatpush1.msra.mxu0 %v988
        %1033 = vmatprep.subr.mxu0 %v987
        %1034 = vmatpush1.msra.mxu0 %v986
        %1035 = vmatprep.subr.mxu0 0.0
        %1036 = vmatpush2.msra.mxu0 0.0
        %1037 = vmatprep.subr.mxu0 0.0
        %1038 = vmatpush2.msra.mxu0 0.0
        %1039 = vmatprep.subr.mxu0 0.0
        %1040 = vmatpush2.msra.mxu0 0.0
        %1041 = vmatprep.subr.mxu0 0.0
        %1042 = vmatpush2.msra.mxu0 0.0
        %1043 = vmatprep.subr.mxu0 0.0
        %1044 = vmatpush2.msra.mxu0 0.0
        %1045 = vmatprep.subr.mxu0 0.0
        %1046 = vmatpush2.msra.mxu0 0.0
        %1047 = vmatprep.subr.mxu0 0.0
        %1048 = vmatpush2.msra.mxu0 0.0
        %1049 = vmatprep.subr.mxu0 0.0
        %1050 = vmatpush2.msra.mxu0 0.0
        %1051 = vmatprep.subr.mxu0 0.0
        %1052 = vmatpush2.msra.mxu0 0.0
        %1053 = vmatprep.subr.mxu0 0.0
        %1054 = vmatpush2.msra.mxu0 0.0
        %1055 = vmatprep.subr.mxu0 0.0
        %1056 = vmatpush2.msra.mxu0 0.0
        %1057 = vmatprep.subr.mxu0 0.0
        %1058 = vmatpush2.msra.mxu0 0.0
        %1059 = vmatprep.subr.mxu0 0.0
        %1060 = vmatpush2.msra.mxu0 0.0
        %1061 = vmatprep.subr.mxu0 0.0
        %1062 = vmatpush2.msra.mxu0 0.0
        %1063 = vmatprep.subr.mxu0 0.0
        %1064 = vmatpush2.msra.mxu0 0.0
        %1065 = vmatprep.subr.mxu0 0.0
        %1066 = vmatpush2.msra.mxu0 0.0
        %1067 = vmatprep.mubr.f32.mxu0 0.0
        %1068 = vmatmul.mubr.f32.gmra.mxu0 %v1001
        %v1069 = vpop.f32.mrf.mxu0
        %v1070 = vadd.f32 %v997, %v1069
        %v1071 = vpop.f32.mrf.mxu0
        %v1072 = vadd.f32 %v997, %v1071
        %1073 = vdwg.mxu0
        %v1074 = vmax.f32 %v1070, -30.0
        %v1075 = vmax.f32 %v1072, -30.0
        %v1076 = vmin.f32 %v1074, 30.0
        %v1077 = vmin.f32 %v1075, 30.0
        %v1078 = vsub.f32 0.0, %v1076
        %v1079 = vsub.f32 0.0, %v1077
        %v1080 = vmul.f32 %v1078, 1.442695
        %v1081 = vpow.pop %v1080
        %v1082 = vmul.f32 %v1079, 1.442695
        %v1083 = vpow.pop %v1082
        %v1084 = vadd.f32 %v1081, 1.0
        %v1085 = vadd.f32 %v1083, 1.0
        %v1086 = vrcp.pop %v1084
        %v1087 = vrcp.pop %v1085
        %v1088 = vmul.f32 %v1084, %v1086
        %v1089 = vmul.f32 %v1085, %v1087
        %v1090 = vsub.f32 2.0, %v1088
        %v1091 = vsub.f32 2.0, %v1089
        %v1092 = vmul.f32 %v1086, %v1090
        %v1093 = vmul.f32 %v1087, %v1091
        %v1094 = vld [vmem:[%s7] sm:$0x3f]
        %v1095 = vld [vmem:[%s8] sm:$0x3f]
        %1097 = vset.pattern.permute.xlu0 0
        %1098 = vperm.xlu0 %1097, %v1095
        %v1099 = vpop.permute.xlu0 %1098
        %v1102 = vsel %vm999, %v1094, 0
        %1104 = vmatprep.subr.mxu0 0.0
        %1105 = vmatpush1.msra.mxu0 0.0
        %1106 = vmatprep.subr.mxu0 0.0
        %1107 = vmatpush1.msra.mxu0 0.0
        %1108 = vmatprep.subr.mxu0 0.0
        %1109 = vmatpush1.msra.mxu0 0.0
        %1110 = vmatprep.subr.mxu0 0.0
        %1111 = vmatpush1.msra.mxu0 0.0
        %1112 = vmatprep.subr.mxu0 0.0
        %1113 = vmatpush1.msra.mxu0 0.0
        %1114 = vmatprep.subr.mxu0 0.0
        %1115 = vmatpush1.msra.mxu0 0.0
        %1116 = vmatprep.subr.mxu0 0.0
        %1117 = vmatpush1.msra.mxu0 0.0
        %1118 = vmatprep.subr.mxu0 0.0
        %1119 = vmatpush1.msra.mxu0 0.0
        %1120 = vmatprep.subr.mxu0 0.0
        %1121 = vmatpush1.msra.mxu0 0.0
        %1122 = vmatprep.subr.mxu0 0.0
        %1123 = vmatpush1.msra.mxu0 0.0
        %1124 = vmatprep.subr.mxu0 0.0
        %1125 = vmatpush1.msra.mxu0 0.0
        %1126 = vmatprep.subr.mxu0 0.0
        %1127 = vmatpush1.msra.mxu0 0.0
        %1128 = vmatprep.subr.mxu0 0.0
        %1129 = vmatpush1.msra.mxu0 0.0
        %1130 = vmatprep.subr.mxu0 %v991
        %1131 = vmatpush1.msra.mxu0 %v990
        %1132 = vmatprep.subr.mxu0 %v989
        %1133 = vmatpush1.msra.mxu0 %v988
        %1134 = vmatprep.subr.mxu0 %v987
        %1135 = vmatpush1.msra.mxu0 %v986
        %1136 = vmatprep.subr.mxu0 0.0
        %1137 = vmatpush2.msra.mxu0 0.0
        %1138 = vmatprep.subr.mxu0 0.0
        %1139 = vmatpush2.msra.mxu0 0.0
        %1140 = vmatprep.subr.mxu0 0.0
        %1141 = vmatpush2.msra.mxu0 0.0
        %1142 = vmatprep.subr.mxu0 0.0
        %1143 = vmatpush2.msra.mxu0 0.0
        %1144 = vmatprep.subr.mxu0 0.0
        %1145 = vmatpush2.msra.mxu0 0.0
        %1146 = vmatprep.subr.mxu0 0.0
        %1147 = vmatpush2.msra.mxu0 0.0
        %1148 = vmatprep.subr.mxu0 0.0
        %1149 = vmatpush2.msra.mxu0 0.0
        %1150 = vmatprep.subr.mxu0 0.0
        %1151 = vmatpush2.msra.mxu0 0.0
        %1152 = vmatprep.subr.mxu0 0.0
        %1153 = vmatpush2.msra.mxu0 0.0
        %1154 = vmatprep.subr.mxu0 0.0
        %1155 = vmatpush2.msra.mxu0 0.0
        %1156 = vmatprep.subr.mxu0 0.0
        %1157 = vmatpush2.msra.mxu0 0.0
        %1158 = vmatprep.subr.mxu0 0.0
        %1159 = vmatpush2.msra.mxu0 0.0
        %1160 = vmatprep.subr.mxu0 0.0
        %1161 = vmatpush2.msra.mxu0 0.0
        %1162 = vmatprep.subr.mxu0 0.0
        %1163 = vmatpush2.msra.mxu0 0.0
        %1164 = vmatprep.subr.mxu0 0.0
        %1165 = vmatpush2.msra.mxu0 0.0
        %1166 = vmatprep.subr.mxu0 0.0
        %1167 = vmatpush2.msra.mxu0 0.0
        %1168 = vmatprep.mubr.f32.mxu0 0.0
        %1169 = vmatmul.mubr.f32.gmra.mxu0 %v1102
        %v1170 = vpop.f32.mrf.mxu0
        %v1171 = vadd.f32 %v1099, %v1170
        %v1172 = vpop.f32.mrf.mxu0
        %v1173 = vadd.f32 %v1099, %v1172
        %1174 = vdwg.mxu0
        %v1175 = vmax.f32 %v1171, -30.0
        %v1176 = vmax.f32 %v1173, -30.0
        %v1177 = vmin.f32 %v1175, 30.0
        %v1178 = vmin.f32 %v1176, 30.0
        %v1179 = vsub.f32 0.0, %v1177
        %v1180 = vsub.f32 0.0, %v1178
        %v1181 = vmul.f32 %v1179, 1.442695
        %v1182 = vpow.pop %v1181
        %v1183 = vmul.f32 %v1180, 1.442695
        %v1184 = vpow.pop %v1183
        %v1185 = vadd.f32 %v1182, 1.0
        %v1186 = vadd.f32 %v1184, 1.0
        %v1187 = vrcp.pop %v1185
        %v1188 = vrcp.pop %v1186
        %v1189 = vmul.f32 %v1185, %v1187
        %v1190 = vmul.f32 %v1186, %v1188
        %v1191 = vsub.f32 2.0, %v1189
        %v1192 = vsub.f32 2.0, %v1190
        %v1193 = vmul.f32 %v1187, %v1191
        %v1194 = vmul.f32 %v1188, %v1192
        %v1195 = vld [vmem:[%s9] sm:$0xff]
        %v1196 = vld [vmem:[%s9 + $0x8] sm:$0xff]
        %v1197 = vld [vmem:[%s9 + $0x10] sm:$0xf]
        %v1198 = vld [vmem:[%s10] sm:$0xff]
        %v1199 = vld [vmem:[%s10 + $0x8] sm:$0xff]
        %v1200 = vld [vmem:[%s10 + $0x10] sm:$0xf]
        %vm1201 = vcmask 48128
        %v1203 = vsel %vm1201, %v1198, 0
        %v1206 = vsel %vm1201, %v1199, 0
        %v1209 = vsel %vm1201, %v1200, 0
        %vm1211 = vcmask 1045504
        %v1213 = vsel %vm1211, %v1193, 0
        %v1216 = vsel %vm1211, %v1194, 0
        %1218 = vmatprep.subr.mxu0 0.0
        %1219 = vmatpush1.msra.mxu0 0.0
        %1220 = vmatprep.subr.mxu0 0.0
        %1221 = vmatpush1.msra.mxu0 0.0
        %1222 = vmatprep.subr.mxu0 0.0
        %1223 = vmatpush1.msra.mxu0 0.0
        %1224 = vmatprep.subr.mxu0 0.0
        %1225 = vmatpush1.msra.mxu0 0.0
        %1226 = vmatprep.subr.mxu0 0.0
        %1227 = vmatpush1.msra.mxu0 0.0
        %1228 = vmatprep.subr.mxu0 0.0
        %1229 = vmatpush1.msra.mxu0 0.0
        %1230 = vmatprep.subr.mxu0 0.0
        %1231 = vmatpush1.msra.mxu0 0.0
        %1232 = vmatprep.subr.mxu0 0.0
        %1233 = vmatpush1.msra.mxu0 0.0
        %1234 = vmatprep.subr.mxu0 0.0
        %1235 = vmatpush1.msra.mxu0 0.0
        %1236 = vmatprep.subr.mxu0 0.0
        %1237 = vmatpush1.msra.mxu0 0.0
        %1238 = vmatprep.subr.mxu0 0.0
        %1239 = vmatpush1.msra.mxu0 0.0
        %1240 = vmatprep.subr.mxu0 0.0
        %1241 = vmatpush1.msra.mxu0 0.0
        %1242 = vmatprep.subr.mxu0 0.0
        %1243 = vmatpush1.msra.mxu0 0.0
        %1244 = vmatprep.subr.mxu0 0.0
        %1245 = vmatpush1.msra.mxu0 0.0
        %1246 = vmatprep.subr.mxu0 0.0
        %1247 = vmatpush1.msra.mxu0 0.0
        %1248 = vmatprep.subr.mxu0 %v1216
        %1249 = vmatpush1.msra.mxu0 %v1213
        %1250 = vmatprep.subr.mxu0 0.0
        %1251 = vmatpush2.msra.mxu0 0.0
        %1252 = vmatprep.subr.mxu0 0.0
        %1253 = vmatpush2.msra.mxu0 0.0
        %1254 = vmatprep.subr.mxu0 0.0
        %1255 = vmatpush2.msra.mxu0 0.0
        %1256 = vmatprep.subr.mxu0 0.0
        %1257 = vmatpush2.msra.mxu0 0.0
        %1258 = vmatprep.subr.mxu0 0.0
        %1259 = vmatpush2.msra.mxu0 0.0
        %1260 = vmatprep.subr.mxu0 0.0
        %1261 = vmatpush2.msra.mxu0 0.0
        %1262 = vmatprep.subr.mxu0 0.0
        %1263 = vmatpush2.msra.mxu0 0.0
        %1264 = vmatprep.subr.mxu0 0.0
        %1265 = vmatpush2.msra.mxu0 0.0
        %1266 = vmatprep.subr.mxu0 0.0
        %1267 = vmatpush2.msra.mxu0 0.0
        %1268 = vmatprep.subr.mxu0 0.0
        %1269 = vmatpush2.msra.mxu0 0.0
        %1270 = vmatprep.subr.mxu0 0.0
        %1271 = vmatpush2.msra.mxu0 0.0
        %1272 = vmatprep.subr.mxu0 0.0
        %1273 = vmatpush2.msra.mxu0 0.0
        %1274 = vmatprep.subr.mxu0 0.0
        %1275 = vmatpush2.msra.mxu0 0.0
        %1276 = vmatprep.subr.mxu0 0.0
        %1277 = vmatpush2.msra.mxu0 0.0
        %1278 = vmatprep.subr.mxu0 0.0
        %1279 = vmatpush2.msra.mxu0 0.0
        %1280 = vmatprep.subr.mxu0 0.0
        %1281 = vmatpush2.msra.mxu0 0.0
        %1282 = vmatprep.mubr.f32.mxu0 0.0
        %1283 = vmatmul.mubr.f32.gmra.mxu0 %v1203
        %v1284 = vpop.f32.mrf.mxu0
        %v1285 = vadd.f32 0.0, %v1284
        %v1286 = vpop.f32.mrf.mxu0
        %v1287 = vadd.f32 0.0, %v1286
        %1288 = vmatprep.mubr.f32.mxu0 0.0
        %1289 = vmatmul.mubr.f32.gmra.mxu0 %v1206
        %v1290 = vpop.f32.mrf.mxu0
        %v1291 = vadd.f32 0.0, %v1290
        %v1292 = vpop.f32.mrf.mxu0
        %v1293 = vadd.f32 0.0, %v1292
        %1294 = vmatprep.mubr.f32.mxu0 0.0
        %1295 = vmatmul.mubr.f32.gmra.mxu0 %v1209
        %v1296 = vpop.f32.mrf.mxu0
        %v1297 = vadd.f32 0.0, %v1296
        %v1298 = vpop.f32.mrf.mxu0
        %v1299 = vadd.f32 0.0, %v1298
        %1300 = vdwg.mxu0
        %vm1301 = vcmask 64512
        %v1303 = vsel %vm1301, %v1195, 0
        %v1306 = vsel %vm1301, %v1196, 0
        %v1309 = vsel %vm1301, %v1197, 0
        %1311 = vmatprep.subr.mxu0 0.0
        %1312 = vmatpush1.msra.mxu0 0.0
        %1313 = vmatprep.subr.mxu0 0.0
        %1314 = vmatpush1.msra.mxu0 0.0
        %1315 = vmatprep.subr.mxu0 0.0
        %1316 = vmatpush1.msra.mxu0 0.0
        %1317 = vmatprep.subr.mxu0 0.0
        %1318 = vmatpush1.msra.mxu0 0.0
        %1319 = vmatprep.subr.mxu0 0.0
        %1320 = vmatpush1.msra.mxu0 0.0
        %1321 = vmatprep.subr.mxu0 0.0
        %1322 = vmatpush1.msra.mxu0 0.0
        %1323 = vmatprep.subr.mxu0 0.0
        %1324 = vmatpush1.msra.mxu0 0.0
        %1325 = vmatprep.subr.mxu0 0.0
        %1326 = vmatpush1.msra.mxu0 0.0
        %1327 = vmatprep.subr.mxu0 0.0
        %1328 = vmatpush1.msra.mxu0 0.0
        %1329 = vmatprep.subr.mxu0 0.0
        %1330 = vmatpush1.msra.mxu0 0.0
        %1331 = vmatprep.subr.mxu0 0.0
        %1332 = vmatpush1.msra.mxu0 0.0
        %1333 = vmatprep.subr.mxu0 0.0
        %1334 = vmatpush1.msra.mxu0 0.0
        %1335 = vmatprep.subr.mxu0 0.0
        %1336 = vmatpush1.msra.mxu0 0.0
        %1337 = vmatprep.subr.mxu0 0.0
        %1338 = vmatpush1.msra.mxu0 0.0
        %1339 = vmatprep.subr.mxu0 0.0
        %1340 = vmatpush1.msra.mxu0 0.0
        %1341 = vmatprep.subr.mxu0 %v1093
        %1342 = vmatpush1.msra.mxu0 %v1092
        %1343 = vmatprep.subr.mxu0 0.0
        %1344 = vmatpush2.msra.mxu0 0.0
        %1345 = vmatprep.subr.mxu0 0.0
        %1346 = vmatpush2.msra.mxu0 0.0
        %1347 = vmatprep.subr.mxu0 0.0
        %1348 = vmatpush2.msra.mxu0 0.0
        %1349 = vmatprep.subr.mxu0 0.0
        %1350 = vmatpush2.msra.mxu0 0.0
        %1351 = vmatprep.subr.mxu0 0.0
        %1352 = vmatpush2.msra.mxu0 0.0
        %1353 = vmatprep.subr.mxu0 0.0
        %1354 = vmatpush2.msra.mxu0 0.0
        %1355 = vmatprep.subr.mxu0 0.0
        %1356 = vmatpush2.msra.mxu0 0.0
        %1357 = vmatprep.subr.mxu0 0.0
        %1358 = vmatpush2.msra.mxu0 0.0
        %1359 = vmatprep.subr.mxu0 0.0
        %1360 = vmatpush2.msra.mxu0 0.0
        %1361 = vmatprep.subr.mxu0 0.0
        %1362 = vmatpush2.msra.mxu0 0.0
        %1363 = vmatprep.subr.mxu0 0.0
        %1364 = vmatpush2.msra.mxu0 0.0
        %1365 = vmatprep.subr.mxu0 0.0
        %1366 = vmatpush2.msra.mxu0 0.0
        %1367 = vmatprep.subr.mxu0 0.0
        %1368 = vmatpush2.msra.mxu0 0.0
        %1369 = vmatprep.subr.mxu0 0.0
        %1370 = vmatpush2.msra.mxu0 0.0
        %1371 = vmatprep.subr.mxu0 0.0
        %1372 = vmatpush2.msra.mxu0 0.0
        %1373 = vmatprep.subr.mxu0 0.0
        %1374 = vmatpush2.msra.mxu0 0.0
        %1375 = vmatprep.mubr.f32.mxu0 0.0
        %1376 = vmatmul.mubr.f32.gmra.mxu0 %v1303
        %v1377 = vpop.f32.mrf.mxu0
        %v1378 = vadd.f32 %v1285, %v1377
        %v1379 = vpop.f32.mrf.mxu0
        %v1380 = vadd.f32 %v1287, %v1379
        %1381 = vmatprep.mubr.f32.mxu0 0.0
        %1382 = vmatmul.mubr.f32.gmra.mxu0 %v1306
        %v1383 = vpop.f32.mrf.mxu0
        %v1384 = vadd.f32 %v1291, %v1383
        %v1385 = vpop.f32.mrf.mxu0
        %v1386 = vadd.f32 %v1293, %v1385
        %1387 = vmatprep.mubr.f32.mxu0 0.0
        %1388 = vmatmul.mubr.f32.gmra.mxu0 %v1309
        %v1389 = vpop.f32.mrf.mxu0
        %v1390 = vadd.f32 %v1297, %v1389
        %v1391 = vpop.f32.mrf.mxu0
        %v1392 = vadd.f32 %v1299, %v1391
        %1393 = vdwg.mxu0
        %v1394 = vld [vmem:[%s11] sm:$0xff]
        %v1395 = vld [vmem:[%s11 + $0x8] sm:$0xff]
        %v1396 = vld [vmem:[%s11 + $0x10] sm:$0xf]
        %1398 = vset.pattern.permute.xlu0 0
        %1399 = vperm.xlu0 %1398, %v1394
        %v1400 = vpop.permute.xlu0 %1399
        %1403 = vset.pattern.permute.xlu0 0
        %1404 = vperm.xlu0 %1403, %v1395
        %v1405 = vpop.permute.xlu0 %1404
        %1408 = vset.pattern.permute.xlu0 0
        %1409 = vperm.xlu0 %1408, %v1396
        %v1410 = vpop.permute.xlu0 %1409
        %v1412 = vadd.f32 %v1378, %v1400
        %v1413 = vadd.f32 %v1380, %v1400
        %v1414 = vadd.f32 %v1384, %v1405
        %v1415 = vadd.f32 %v1386, %v1405
        %v1416 = vadd.f32 %v1390, %v1410
        %v1417 = vadd.f32 %v1392, %v1410
        %v1418 = vmax.f32 %v1412, -30.0
        %v1419 = vmax.f32 %v1413, -30.0
        %v1420 = vmax.f32 %v1414, -30.0
        %v1421 = vmax.f32 %v1415, -30.0
        %v1422 = vmax.f32 %v1416, -30.0
        %v1423 = vmax.f32 %v1417, -30.0
        %v1424 = vmin.f32 %v1418, 30.0
        %v1425 = vmin.f32 %v1419, 30.0
        %v1426 = vmin.f32 %v1420, 30.0
        %v1427 = vmin.f32 %v1421, 30.0
        %v1428 = vmin.f32 %v1422, 30.0
        %v1429 = vmin.f32 %v1423, 30.0
        %v1430 = vsub.f32 0.0, %v1424
        %v1431 = vsub.f32 0.0, %v1425
        %v1432 = vsub.f32 0.0, %v1426
        %v1433 = vsub.f32 0.0, %v1427
        %v1434 = vsub.f32 0.0, %v1428
        %v1435 = vsub.f32 0.0, %v1429
        %v1436 = vmul.f32 %v1430, 1.442695
        %v1437 = vpow.pop %v1436
        %v1438 = vmul.f32 %v1431, 1.442695
        %v1439 = vpow.pop %v1438
        %v1440 = vmul.f32 %v1432, 1.442695
        %v1441 = vpow.pop %v1440
        %v1442 = vmul.f32 %v1433, 1.442695
        %v1443 = vpow.pop %v1442
        %v1444 = vmul.f32 %v1434, 1.442695
        %v1445 = vpow.pop %v1444
        %v1446 = vmul.f32 %v1435, 1.442695
        %v1447 = vpow.pop %v1446
        %v1448 = vadd.f32 %v1437, 1.0
        %v1449 = vadd.f32 %v1439, 1.0
        %v1450 = vadd.f32 %v1441, 1.0
        %v1451 = vadd.f32 %v1443, 1.0
        %v1452 = vadd.f32 %v1445, 1.0
        %v1453 = vadd.f32 %v1447, 1.0
        %v1454 = vrcp.pop %v1448
        %v1455 = vrcp.pop %v1449
        %v1456 = vrcp.pop %v1450
        %v1457 = vrcp.pop %v1451
        %v1458 = vrcp.pop %v1452
        %v1459 = vrcp.pop %v1453
        %v1460 = vmul.f32 %v1448, %v1454
        %v1461 = vmul.f32 %v1449, %v1455
        %v1462 = vmul.f32 %v1450, %v1456
        %v1463 = vmul.f32 %v1451, %v1457
        %v1464 = vmul.f32 %v1452, %v1458
        %v1465 = vmul.f32 %v1453, %v1459
        %v1466 = vsub.f32 2.0, %v1460
        %v1467 = vsub.f32 2.0, %v1461
        %v1468 = vsub.f32 2.0, %v1462
        %v1469 = vsub.f32 2.0, %v1463
        %v1470 = vsub.f32 2.0, %v1464
        %v1471 = vsub.f32 2.0, %v1465
        %v1472 = vmul.f32 %v1454, %v1466
        %v1473 = vmul.f32 %v1455, %v1467
        %v1474 = vmul.f32 %v1456, %v1468
        %v1475 = vmul.f32 %v1457, %v1469
        %v1476 = vmul.f32 %v1458, %v1470
        %v1477 = vmul.f32 %v1459, %v1471
        %v1478 = vld [vmem:[%s12] sm:$0xff]
        %v1479 = vld [vmem:[%s12 + $0x8] sm:$0xf]
        %v1480 = vld [vmem:[%s13] sm:$0xff]
        %v1481 = vld [vmem:[%s13 + $0x8] sm:$0xf]
        %1483 = vset.pattern.permute.xlu0 0
        %1484 = vperm.xlu0 %1483, %v1480
        %v1485 = vpop.permute.xlu0 %1484
        %1488 = vset.pattern.permute.xlu0 0
        %1489 = vperm.xlu0 %1488, %v1481
        %v1490 = vpop.permute.xlu0 %1489
        %vm1492 = vcmask 162816
        %v1494 = vsel %vm1492, %v1478, 0
        %v1497 = vsel %vm1492, %v1479, 0
        %vm1499 = vcmask 1043456
        %v1501 = vsel %vm1499, %v1476, 0
        %v1504 = vsel %vm1499, %v1477, 0
        %1506 = vmatprep.subr.mxu0 0.0
        %1507 = vmatpush1.msra.mxu0 0.0
        %1508 = vmatprep.subr.mxu0 0.0
        %1509 = vmatpush1.msra.mxu0 0.0
        %1510 = vmatprep.subr.mxu0 0.0
        %1511 = vmatpush1.msra.mxu0 0.0
        %1512 = vmatprep.subr.mxu0 0.0
        %1513 = vmatpush1.msra.mxu0 0.0
        %1514 = vmatprep.subr.mxu0 0.0
        %1515 = vmatpush1.msra.mxu0 0.0
        %1516 = vmatprep.subr.mxu0 0.0
        %1517 = vmatpush1.msra.mxu0 0.0
        %1518 = vmatprep.subr.mxu0 0.0
        %1519 = vmatpush1.msra.mxu0 0.0
        %1520 = vmatprep.subr.mxu0 0.0
        %1521 = vmatpush1.msra.mxu0 0.0
        %1522 = vmatprep.subr.mxu0 0.0
        %1523 = vmatpush1.msra.mxu0 0.0
        %1524 = vmatprep.subr.mxu0 0.0
        %1525 = vmatpush1.msra.mxu0 0.0
        %1526 = vmatprep.subr.mxu0 0.0
        %1527 = vmatpush1.msra.mxu0 0.0
        %1528 = vmatprep.subr.mxu0 0.0
        %1529 = vmatpush1.msra.mxu0 0.0
        %1530 = vmatprep.subr.mxu0 0.0
        %1531 = vmatpush1.msra.mxu0 0.0
        %1532 = vmatprep.subr.mxu0 %v1504
        %1533 = vmatpush1.msra.mxu0 %v1501
        %1534 = vmatprep.subr.mxu0 %v1475
        %1535 = vmatpush1.msra.mxu0 %v1474
        %1536 = vmatprep.subr.mxu0 %v1473
        %1537 = vmatpush1.msra.mxu0 %v1472
        %1538 = vmatprep.subr.mxu0 0.0
        %1539 = vmatpush2.msra.mxu0 0.0
        %1540 = vmatprep.subr.mxu0 0.0
        %1541 = vmatpush2.msra.mxu0 0.0
        %1542 = vmatprep.subr.mxu0 0.0
        %1543 = vmatpush2.msra.mxu0 0.0
        %1544 = vmatprep.subr.mxu0 0.0
        %1545 = vmatpush2.msra.mxu0 0.0
        %1546 = vmatprep.subr.mxu0 0.0
        %1547 = vmatpush2.msra.mxu0 0.0
        %1548 = vmatprep.subr.mxu0 0.0
        %1549 = vmatpush2.msra.mxu0 0.0
        %1550 = vmatprep.subr.mxu0 0.0
        %1551 = vmatpush2.msra.mxu0 0.0
        %1552 = vmatprep.subr.mxu0 0.0
        %1553 = vmatpush2.msra.mxu0 0.0
        %1554 = vmatprep.subr.mxu0 0.0
        %1555 = vmatpush2.msra.mxu0 0.0
        %1556 = vmatprep.subr.mxu0 0.0
        %1557 = vmatpush2.msra.mxu0 0.0
        %1558 = vmatprep.subr.mxu0 0.0
        %1559 = vmatpush2.msra.mxu0 0.0
        %1560 = vmatprep.subr.mxu0 0.0
        %1561 = vmatpush2.msra.mxu0 0.0
        %1562 = vmatprep.subr.mxu0 0.0
        %1563 = vmatpush2.msra.mxu0 0.0
        %1564 = vmatprep.subr.mxu0 0.0
        %1565 = vmatpush2.msra.mxu0 0.0
        %1566 = vmatprep.subr.mxu0 0.0
        %1567 = vmatpush2.msra.mxu0 0.0
        %1568 = vmatprep.subr.mxu0 0.0
        %1569 = vmatpush2.msra.mxu0 0.0
        %1570 = vmatprep.mubr.f32.mxu0 0.0
        %1571 = vmatmul.mubr.f32.gmra.mxu0 %v1494
        %v1572 = vpop.f32.mrf.mxu0
        %v1573 = vadd.f32 %v1485, %v1572
        %v1574 = vpop.f32.mrf.mxu0
        %v1575 = vadd.f32 %v1485, %v1574
        %1576 = vmatprep.mubr.f32.mxu0 0.0
        %1577 = vmatmul.mubr.f32.gmra.mxu0 %v1497
        %v1578 = vpop.f32.mrf.mxu0
        %v1579 = vadd.f32 %v1490, %v1578
        %v1580 = vpop.f32.mrf.mxu0
        %v1581 = vadd.f32 %v1490, %v1580
        %1582 = vdwg.mxu0
        %v1583 = vmax.f32 %v1573, -30.0
        %v1584 = vmax.f32 %v1575, -30.0
        %v1585 = vmax.f32 %v1579, -30.0
        %v1586 = vmax.f32 %v1581, -30.0
        %v1587 = vmin.f32 %v1583, 30.0
        %v1588 = vmin.f32 %v1584, 30.0
        %v1589 = vmin.f32 %v1585, 30.0
        %v1590 = vmin.f32 %v1586, 30.0
        %v1591 = vsub.f32 0.0, %v1587
        %v1592 = vsub.f32 0.0, %v1588
        %v1593 = vsub.f32 0.0, %v1589
        %v1594 = vsub.f32 0.0, %v1590
        %v1595 = vmul.f32 %v1591, 1.442695
        %v1596 = vpow.pop %v1595
        %v1597 = vmul.f32 %v1592, 1.442695
        %v1598 = vpow.pop %v1597
        %v1599 = vmul.f32 %v1593, 1.442695
        %v1600 = vpow.pop %v1599
        %v1601 = vmul.f32 %v1594, 1.442695
        %v1602 = vpow.pop %v1601
        %v1603 = vadd.f32 %v1596, 1.0
        %v1604 = vadd.f32 %v1598, 1.0
        %v1605 = vadd.f32 %v1600, 1.0
        %v1606 = vadd.f32 %v1602, 1.0
        %v1607 = vrcp.pop %v1603
        %v1608 = vrcp.pop %v1604
        %v1609 = vrcp.pop %v1605
        %v1610 = vrcp.pop %v1606
        %v1611 = vmul.f32 %v1603, %v1607
        %v1612 = vmul.f32 %v1604, %v1608
        %v1613 = vmul.f32 %v1605, %v1609
        %v1614 = vmul.f32 %v1606, %v1610
        %v1615 = vsub.f32 2.0, %v1611
        %v1616 = vsub.f32 2.0, %v1612
        %v1617 = vsub.f32 2.0, %v1613
        %v1618 = vsub.f32 2.0, %v1614
        %v1619 = vmul.f32 %v1607, %v1615
        %v1620 = vmul.f32 %v1608, %v1616
        %v1621 = vmul.f32 %v1609, %v1617
        %v1622 = vmul.f32 %v1610, %v1618
        %v1623 = vld [vmem:[%s14] sm:$0xff]
        %v1624 = vld [vmem:[%s14 + $0x8] sm:$0x3]
        %v1625 = vld [vmem:[%s15] sm:$0xff]
        %v1626 = vld [vmem:[%s15 + $0x8] sm:$0x3]
        %1628 = vset.pattern.permute.xlu0 0
        %1629 = vperm.xlu0 %1628, %v1625
        %v1630 = vpop.permute.xlu0 %1629
        %1633 = vset.pattern.permute.xlu0 0
        %1634 = vperm.xlu0 %1633, %v1626
        %v1635 = vpop.permute.xlu0 %1634
        %vm1637 = vcmask 97280
        %v1639 = vsel %vm1637, %v1623, 0
        %v1642 = vsel %vm1637, %v1624, 0
        %v1645 = vsel %vm1499, %v1621, 0
        %v1648 = vsel %vm1499, %v1622, 0
        %1650 = vmatprep.subr.mxu0 0.0
        %1651 = vmatpush1.msra.mxu0 0.0
        %1652 = vmatprep.subr.mxu0 0.0
        %1653 = vmatpush1.msra.mxu0 0.0
        %1654 = vmatprep.subr.mxu0 0.0
        %1655 = vmatpush1.msra.mxu0 0.0
        %1656 = vmatprep.subr.mxu0 0.0
        %1657 = vmatpush1.msra.mxu0 0.0
        %1658 = vmatprep.subr.mxu0 0.0
        %1659 = vmatpush1.msra.mxu0 0.0
        %1660 = vmatprep.subr.mxu0 0.0
        %1661 = vmatpush1.msra.mxu0 0.0
        %1662 = vmatprep.subr.mxu0 0.0
        %1663 = vmatpush1.msra.mxu0 0.0
        %1664 = vmatprep.subr.mxu0 0.0
        %1665 = vmatpush1.msra.mxu0 0.0
        %1666 = vmatprep.subr.mxu0 0.0
        %1667 = vmatpush1.msra.mxu0 0.0
        %1668 = vmatprep.subr.mxu0 0.0
        %1669 = vmatpush1.msra.mxu0 0.0
        %1670 = vmatprep.subr.mxu0 0.0
        %1671 = vmatpush1.msra.mxu0 0.0
        %1672 = vmatprep.subr.mxu0 0.0
        %1673 = vmatpush1.msra.mxu0 0.0
        %1674 = vmatprep.subr.mxu0 0.0
        %1675 = vmatpush1.msra.mxu0 0.0
        %1676 = vmatprep.subr.mxu0 0.0
        %1677 = vmatpush1.msra.mxu0 0.0
        %1678 = vmatprep.subr.mxu0 %v1648
        %1679 = vmatpush1.msra.mxu0 %v1645
        %1680 = vmatprep.subr.mxu0 %v1620
        %1681 = vmatpush1.msra.mxu0 %v1619
        %1682 = vmatprep.subr.mxu0 0.0
        %1683 = vmatpush2.msra.mxu0 0.0
        %1684 = vmatprep.subr.mxu0 0.0
        %1685 = vmatpush2.msra.mxu0 0.0
        %1686 = vmatprep.subr.mxu0 0.0
        %1687 = vmatpush2.msra.mxu0 0.0
        %1688 = vmatprep.subr.mxu0 0.0
        %1689 = vmatpush2.msra.mxu0 0.0
        %1690 = vmatprep.subr.mxu0 0.0
        %1691 = vmatpush2.msra.mxu0 0.0
        %1692 = vmatprep.subr.mxu0 0.0
        %1693 = vmatpush2.msra.mxu0 0.0
        %1694 = vmatprep.subr.mxu0 0.0
        %1695 = vmatpush2.msra.mxu0 0.0
        %1696 = vmatprep.subr.mxu0 0.0
        %1697 = vmatpush2.msra.mxu0 0.0
        %1698 = vmatprep.subr.mxu0 0.0
        %1699 = vmatpush2.msra.mxu0 0.0
        %1700 = vmatprep.subr.mxu0 0.0
        %1701 = vmatpush2.msra.mxu0 0.0
        %1702 = vmatprep.subr.mxu0 0.0
        %1703 = vmatpush2.msra.mxu0 0.0
        %1704 = vmatprep.subr.mxu0 0.0
        %1705 = vmatpush2.msra.mxu0 0.0
        %1706 = vmatprep.subr.mxu0 0.0
        %1707 = vmatpush2.msra.mxu0 0.0
        %1708 = vmatprep.subr.mxu0 0.0
        %1709 = vmatpush2.msra.mxu0 0.0
        %1710 = vmatprep.subr.mxu0 0.0
        %1711 = vmatpush2.msra.mxu0 0.0
        %1712 = vmatprep.subr.mxu0 0.0
        %1713 = vmatpush2.msra.mxu0 0.0
        %1714 = vmatprep.mubr.f32.mxu0 0.0
        %1715 = vmatmul.mubr.f32.gmra.mxu0 %v1639
        %v1716 = vpop.f32.mrf.mxu0
        %v1717 = vadd.f32 %v1630, %v1716
        %v1718 = vpop.f32.mrf.mxu0
        %v1719 = vadd.f32 %v1630, %v1718
        %1720 = vmatprep.mubr.f32.mxu0 0.0
        %1721 = vmatmul.mubr.f32.gmra.mxu0 %v1642
        %v1722 = vpop.f32.mrf.mxu0
        %v1723 = vadd.f32 %v1635, %v1722
        %v1724 = vpop.f32.mrf.mxu0
        %v1725 = vadd.f32 %v1635, %v1724
        %1726 = vdwg.mxu0
        %v1727 = vmax.f32 %v1717, -30.0
        %v1728 = vmax.f32 %v1719, -30.0
        %v1729 = vmax.f32 %v1723, -30.0
        %v1730 = vmax.f32 %v1725, -30.0
        %v1731 = vmin.f32 %v1727, 30.0
        %v1732 = vmin.f32 %v1728, 30.0
        %v1733 = vmin.f32 %v1729, 30.0
        %v1734 = vmin.f32 %v1730, 30.0
        %v1735 = vsub.f32 0.0, %v1731
        %v1736 = vsub.f32 0.0, %v1732
        %v1737 = vsub.f32 0.0, %v1733
        %v1738 = vsub.f32 0.0, %v1734
        %v1739 = vmul.f32 %v1735, 1.442695
        %v1740 = vpow.pop %v1739
        %v1741 = vmul.f32 %v1736, 1.442695
        %v1742 = vpow.pop %v1741
        %v1743 = vmul.f32 %v1737, 1.442695
        %v1744 = vpow.pop %v1743
        %v1745 = vmul.f32 %v1738, 1.442695
        %v1746 = vpow.pop %v1745
        %v1747 = vadd.f32 %v1740, 1.0
        %v1748 = vadd.f32 %v1742, 1.0
        %v1749 = vadd.f32 %v1744, 1.0
        %v1750 = vadd.f32 %v1746, 1.0
        %v1751 = vrcp.pop %v1747
        %v1752 = vrcp.pop %v1748
        %v1753 = vrcp.pop %v1749
        %v1754 = vrcp.pop %v1750
        %v1755 = vmul.f32 %v1747, %v1751
        %v1756 = vmul.f32 %v1748, %v1752
        %v1757 = vmul.f32 %v1749, %v1753
        %v1758 = vmul.f32 %v1750, %v1754
        %v1759 = vsub.f32 2.0, %v1755
        %v1760 = vsub.f32 2.0, %v1756
        %v1761 = vsub.f32 2.0, %v1757
        %v1762 = vsub.f32 2.0, %v1758
        %v1763 = vmul.f32 %v1751, %v1759
        %v1764 = vmul.f32 %v1752, %v1760
        %v1765 = vmul.f32 %v1753, %v1761
        %v1766 = vmul.f32 %v1754, %v1762
        %v1767 = vld [vmem:[%s16] sm:$0x1]
        %v1768 = vld [vmem:[#allocation2] sm:$0x1]
        %1770 = vset.pattern.permute.xlu0 0
        %1771 = vperm.xlu0 %1770, %v1768
        %v1772 = vpop.permute.xlu0 %1771
        %v1774 = vlaneseq
        %v1775 = vshrl.u32 %v1774, 7
        %v1776 = vsub.s32 0, %v1775
        %v1777 = vrot.slane %v1772, %v1776
        %vm1778 = vcmask 80896
        %v1780 = vsel %vm1778, %v1767, 0
        %vm1782 = vcmask 1041408
        %v1784 = vsel %vm1782, %v1765, 0
        %v1787 = vsel %vm1782, %v1766, 0
        %1789 = vmatprep.subr.mxu0 0.0
        %1790 = vmatpush1.msra.mxu0 0.0
        %1791 = vmatprep.subr.mxu0 0.0
        %1792 = vmatpush1.msra.mxu0 0.0
        %1793 = vmatprep.subr.mxu0 0.0
        %1794 = vmatpush1.msra.mxu0 0.0
        %1795 = vmatprep.subr.mxu0 0.0
        %1796 = vmatpush1.msra.mxu0 0.0
        %1797 = vmatprep.subr.mxu0 0.0
        %1798 = vmatpush1.msra.mxu0 0.0
        %1799 = vmatprep.subr.mxu0 0.0
        %1800 = vmatpush1.msra.mxu0 0.0
        %1801 = vmatprep.subr.mxu0 0.0
        %1802 = vmatpush1.msra.mxu0 0.0
        %1803 = vmatprep.subr.mxu0 0.0
        %1804 = vmatpush1.msra.mxu0 0.0
        %1805 = vmatprep.subr.mxu0 0.0
        %1806 = vmatpush1.msra.mxu0 0.0
        %1807 = vmatprep.subr.mxu0 0.0
        %1808 = vmatpush1.msra.mxu0 0.0
        %1809 = vmatprep.subr.mxu0 0.0
        %1810 = vmatpush1.msra.mxu0 0.0
        %1811 = vmatprep.subr.mxu0 0.0
        %1812 = vmatpush1.msra.mxu0 0.0
        %1813 = vmatprep.subr.mxu0 0.0
        %1814 = vmatpush1.msra.mxu0 0.0
        %1815 = vmatprep.subr.mxu0 0.0
        %1816 = vmatpush1.msra.mxu0 0.0
        %1817 = vmatprep.subr.mxu0 %v1787
        %1818 = vmatpush1.msra.mxu0 %v1784
        %1819 = vmatprep.subr.mxu0 %v1764
        %1820 = vmatpush1.msra.mxu0 %v1763
        %1821 = vmatprep.subr.mxu0 0.0
        %1822 = vmatpush2.msra.mxu0 0.0
        %1823 = vmatprep.subr.mxu0 0.0
        %1824 = vmatpush2.msra.mxu0 0.0
        %1825 = vmatprep.subr.mxu0 0.0
        %1826 = vmatpush2.msra.mxu0 0.0
        %1827 = vmatprep.subr.mxu0 0.0
        %1828 = vmatpush2.msra.mxu0 0.0
        %1829 = vmatprep.subr.mxu0 0.0
        %1830 = vmatpush2.msra.mxu0 0.0
        %1831 = vmatprep.subr.mxu0 0.0
        %1832 = vmatpush2.msra.mxu0 0.0
        %1833 = vmatprep.subr.mxu0 0.0
        %1834 = vmatpush2.msra.mxu0 0.0
        %1835 = vmatprep.subr.mxu0 0.0
        %1836 = vmatpush2.msra.mxu0 0.0
        %1837 = vmatprep.subr.mxu0 0.0
        %1838 = vmatpush2.msra.mxu0 0.0
        %1839 = vmatprep.subr.mxu0 0.0
        %1840 = vmatpush2.msra.mxu0 0.0
        %1841 = vmatprep.subr.mxu0 0.0
        %1842 = vmatpush2.msra.mxu0 0.0
        %1843 = vmatprep.subr.mxu0 0.0
        %1844 = vmatpush2.msra.mxu0 0.0
        %1845 = vmatprep.subr.mxu0 0.0
        %1846 = vmatpush2.msra.mxu0 0.0
        %1847 = vmatprep.subr.mxu0 0.0
        %1848 = vmatpush2.msra.mxu0 0.0
        %1849 = vmatprep.subr.mxu0 0.0
        %1850 = vmatpush2.msra.mxu0 0.0
        %1851 = vmatprep.subr.mxu0 0.0
        %1852 = vmatpush2.msra.mxu0 0.0
        %1853 = vmatprep.mubr.f32.mxu0 0.0
        %1854 = vmatmul.mubr.f32.gmra.mxu0 %v1780
        %v1855 = vpop.f32.mrf.mxu0
        %v1856 = vadd.f32 %v1777, %v1855
        %v1857 = vpop.f32.mrf.mxu0
        %v1858 = vadd.f32 %v1777, %v1857
        %1859 = vdwg.mxu0
        %v1862 = vcombine.low %v1856, %v1858
        %v1864 = vunpack.c.l.s4 1966171168
        %v1865 = vunpack.c.0.s8 %v1864
        %v1866 = vlaneseq
        %v1867 = vshrl.u32 %v1866, 7
        %v1868 = vsub.s32 %v1865, %v1867
        %v1869 = vrot.slane %v1862, %v1868
        %v1871 = vunpack.c.l.s4 1966171168
        %v1872 = vunpack.c.0.s8 %v1871
        %v1873 = vlaneseq
        %v1874 = vshrl.u32 %v1873, 7
        %v1875 = vsub.s32 %v1872, %v1874
        %v1876 = vrot.slane %v1869, %v1875
        %v1878 = vlaneseq
        %vm1879 = vcmp.ge.s32.totalorder %v1878, 0
        %vm1880 = vcmp.lt.s32.totalorder %v1878, 256
        %vm1881 = vmand %vm1879, %vm1880
        %1882 = vst.msk [vmem:[%s601] sm:$0x3] %vm1881, %v1876
        %s1883 = sand.u32 %s425, 1
        %s1884 = scalar_lea.sflag [#allocation5], %s1883
        %s1885 = sand.u32 %s425, 1
        %s1886 = smul.addr %s1885, 2
        %s1887 = scalar_lea.vmem [#allocation4], %s1886
        // Predicated region
        $region116: #{mlpsvy1x_forward.1} parent=110 // pred_check
          %p1888 = pneg %p435
        $region117: #{mlpsvy1x_forward.1} parent=110 // pred_check_branch
          %1890 = sbr.rel (%p1888) target = $region119
        $region118: #{mlpsvy1x_forward.1} parent=110 // pred_region
          %s1891 = smul.u32 2, %s34
          %s1893 = ssub.s32 32, 32
          %1894 = vsyncadd %s1884, %s1893
          %s1895 = smul.addr %s1891, 16
          %s1896 = scalar_lea.hbm %s18, %s1895
          %s1898 = sshll.u32 %s1887, 4
          %s1899 = int_to_ptr.vmem [resolvable:$true] %s1898
          %1901 = dma.vmem_to_hbm [thread:$0]  %s1899, 32, %s1896, %s1884
        $region119: #{mlpsvy1x_forward.1} parent=110 // pred_fallthru
          _
      $region111: #{mlpsvy1x_forward.1} parent=5 // pred_fallthru
        _
      %p1902 = scmp.le.s32.totalorder 2, %s29
      // Predicated region
      $region120: #{mlpsvy1x_forward.1} parent=5 // pred_check
        %p1903 = pneg %p1902
      $region121: #{mlpsvy1x_forward.1} parent=5 // pred_check_branch
        %1905 = sbr.rel (%p1903) target = $region123
      $region122: #{mlpsvy1x_forward.1} parent=5 // pred_region
        %s1906 = ssub.s32 %s29, 2
        // Predicated region
        $region124: #{mlpsvy1x_forward.1} parent=122 // pred_check
          %p1907 = pneg %p441
        $region125: #{mlpsvy1x_forward.1} parent=122 // pred_check_branch
          %1909 = sbr.rel (%p1907) target = $region127
        $region126: #{mlpsvy1x_forward.1} parent=122 // pred_region
          %s1910 = sand.u32 %s426, 1
          %s1911 = scalar_lea.sflag [#allocation5], %s1910
          %s1912 = sand.u32 %s426, 1
          %s1913 = smul.addr %s1912, 2
          %s1914 = scalar_lea.vmem [#allocation4], %s1913
          %1915 = dma.done %s1911, 32
        $region127: #{mlpsvy1x_forward.1} parent=122 // pred_fallthru
          _
      $region123: #{mlpsvy1x_forward.1} parent=5 // pred_fallthru
        _
    $region6: #{mlpsvy1x_forward.1} parent=1 // loop_footer
      %s33 = sadd.s32 1, %s29
    $region7: #{mlpsvy1x_forward.1} parent=1 // loop_footer_branch
      %28 = sbr.rel target = $region3
    $region8: #{mlpsvy1x_forward.1} parent=1 // loop_exit
      _
    %1916 = vsyncpa [#allocation5], 1
    %s1917 = scalar_lea.sflag [#allocation5], 1
    %1918 = vsyncpa %s1917, 1

</llo_original>
